<compile_context>
chip_gen: v6e
topology: v6e:2x2x1
jax: 0.10.0
libtpu: 0.0.40
codegen_flags: <defaults>
</compile_context>

<pallas_src>
import functools
import math

import jax
import jax.numpy as jnp
from jax.experimental import pallas as pl
from jax.experimental.pallas import tpu as pltpu


def _round_up(x, m):
    return ((x + m - 1) // m) * m


def _gcn_kernel(has_bias, compute_dtype, *refs):
    """One (row-tile i, sparse-column-tile k) step of out = (adj @ x) @ W + b."""
    ids_ref, cnt_ref = refs[0], refs[1]          # SMEM scalar-prefetch refs
    del ids_ref                                   # consumed by the index_maps only
    if has_bias:
        adj_ref, x_ref, w_ref, b_ref, o_ref, acc_ref = refs[2:]
    else:
        adj_ref, x_ref, w_ref, o_ref, acc_ref = refs[2:]
        b_ref = None

    i = pl.program_id(0)
    k = pl.program_id(1)

    @pl.when(k == 0)
    def _():
        acc_ref[...] = jnp.zeros_like(acc_ref)

    # Skip padded steps (k >= number of nonzero adj column blocks in this row
    # block).  Their block index repeats the previous one, so their DMA is
    # skipped by the pipeline as well.
    @pl.when(k < cnt_ref[i])
    def _():
        # adj tile arrives in its HBM dtype; cast on the VPU (hidden under DMA)
        # so the MXU runs a single-pass bf16 matmul with f32 accumulation.
        acc_ref[...] += jnp.dot(
            adj_ref[...].astype(compute_dtype),
            x_ref[...],
            preferred_element_type=jnp.float32,
        )

    @pl.when(k == pl.num_programs(1) - 1)
    def _():
        # Cheap epilogue matmul: [tm, Fin_p] @ [Fin_p, Fout_p] in compute dtype.
        out = jnp.dot(
            acc_ref[...].astype(compute_dtype),
            w_ref[...],
            preferred_element_type=jnp.float32,
        )
        if b_ref is not None:
            out = out + b_ref[...]
        o_ref[...] = out.astype(o_ref.dtype)


def sp_graph_convolution(
    x,
    adj,
    weight,
    bias=None,
    *,
    tm=512,
    tk=512,
    compute_dtype=jnp.bfloat16,
    out_dtype=jnp.float32,
    block_sparse=True,
    max_blocks_per_row=None,
    vmem_limit_bytes=None,
):
    """Pallas-backed forward pass of SPGraphConvolution.

    x:      [N, Fin]     float32
    adj:    [N, N]       dense adjacency (any float dtype; bf16 upstream avoids
                         any conversion traffic, f32 is cast in-kernel)
    weight: [Fin, Fout]  float32
    bias:   [Fout] float32 or None
    returns [N, Fout]    out_dtype

    block_sparse:       scan adj once for all-zero (tm x tk) blocks and skip
                        them (DMA + MXU).  For repeated layers the scan should
                        be hoisted/reused since the graph structure is fixed.
    max_blocks_per_row: optional static upper bound on nonzero column blocks
                        per row block; shrinks the grid's k axis.  Blocks
                        beyond this bound are dropped, so it must be a true
                        upper bound.
    """
    n, fin = x.shape
    fin_w, fout = weight.shape
    assert fin_w == fin and adj.shape == (n, n)

    # Lane-dense feature dims (multiples of 128); zero padding keeps math exact.
    # TODO(synk): when compute-bound on v6e/v7x, round fin_p to 256 for full
    # MXU column utilization (irrelevant while adj-bandwidth-bound).
    fin_p = _round_up(fin, 128)
    fout_p = _round_up(fout, 128)

    # Tile sizes: tm multiple of 8 (sublane), tk multiple of 128 (lane).  Clamp
    # tm so small graphs still produce >=2 row tiles (v7x has 2 TensorCores and
    # axis 0 is "parallel"); clamp both to the problem size.
    tm = max(8, _round_up(int(tm), 8))
    tm = min(tm, _round_up(max(1, -(-n // 2)), 8), _round_up(n, 8))
    tk = max(128, _round_up(int(tk), 128))
    tk = min(tk, _round_up(n, 128))

    n_rows = _round_up(n, tm)
    n_cols = _round_up(n, tk)
    nrb = n_rows // tm
    ncb = n_cols // tk

    # --- adj: no cast, no copy when tile-aligned (the common large-graph case).
    if (n_rows, n_cols) != (n, n):
        adj_p = jnp.pad(adj, ((0, n_rows - n), (0, n_cols - n)))
    else:
        adj_p = adj  # zero-copy; dtype preserved, cast happens in-kernel

    # --- small operands: pad/cast freely (negligible traffic).
    x_p = jnp.zeros((n_cols, fin_p), dtype=compute_dtype).at[:n, :fin].set(
        x.astype(compute_dtype)
    )
    w_p = jnp.zeros((fin_p, fout_p), dtype=compute_dtype).at[:fin, :fout].set(
        weight.astype(compute_dtype)
    )
    has_bias = bias is not None
    if has_bias:
        b_p = jnp.zeros((1, fout_p), dtype=jnp.float32).at[0, :fout].set(
            bias.astype(jnp.float32)
        )

    # --- block-sparsity structure (scalar-prefetched into SMEM).
    if block_sparse:
        kb = ncb if max_blocks_per_row is None else max(
            1, min(int(max_blocks_per_row), ncb)
        )
        # One reduction pass over adj; hoist/reuse across layers when possible.
        bm = jnp.abs(adj_p).reshape(nrb, tm, ncb, tk).max(axis=(1, 3)) > 0
        counts = jnp.minimum(bm.sum(axis=1).astype(jnp.int32), jnp.int32(kb))
        order = jnp.argsort(jnp.logical_not(bm), axis=1).astype(jnp.int32)[:, :kb]
        last = jnp.take_along_axis(
            order, jnp.maximum(counts - 1, 0)[:, None], axis=1
        )
        pos = jnp.arange(kb, dtype=jnp.int32)[None, :]
        # Padded entries repeat the last valid block id -> no extra DMA.
        ids = jnp.where(pos < counts[:, None], order, last)
    else:
        kb = ncb
        ids = jnp.broadcast_to(
            jnp.arange(kb, dtype=jnp.int32)[None, :], (nrb, kb)
        )
        counts = jnp.full((nrb,), ncb, dtype=jnp.int32)

    # --- specs (index_maps receive the scalar-prefetch refs positionally).
    in_specs = [
        pl.BlockSpec((tm, tk), lambda i, k, ids_ref, cnt_ref: (i, ids_ref[i, k])),
        pl.BlockSpec((tk, fin_p), lambda i, k, ids_ref, cnt_ref: (ids_ref[i, k], 0)),
        pl.BlockSpec((fin_p, fout_p), lambda i, k, ids_ref, cnt_ref: (0, 0)),
    ]
    operands = [ids, counts, adj_p, x_p, w_p]
    if has_bias:
        in_specs.append(
            pl.BlockSpec((1, fout_p), lambda i, k, ids_ref, cnt_ref: (0, 0))
        )
        operands.append(b_p)
    out_specs = pl.BlockSpec((tm, fout_p), lambda i, k, ids_ref, cnt_ref: (i, 0))

    # --- explicit VMEM budget (double-buffered inputs/outputs + accumulator).
    adj_bytes = adj_p.dtype.itemsize
    cd_bytes = jnp.dtype(compute_dtype).itemsize
    od_bytes = jnp.dtype(out_dtype).itemsize
    vmem_est = (
        2 * tm * tk * adj_bytes
        + 2 * tk * fin_p * cd_bytes
        + 2 * fin_p * fout_p * cd_bytes
        + (2 * fout_p * 4 if has_bias else 0)
        + 2 * tm * fout_p * od_bytes
        + tm * fin_p * 4
    )
    assert vmem_est <= 48 * 2**20, (
        f"tile working set {vmem_est/2**20:.1f} MiB too large for v7x VMEM; "
        "reduce tm/tk"
    )
    if vmem_limit_bytes is None:
        vmem_limit_bytes = max(32 * 2**20, min(56 * 2**20, vmem_est + 8 * 2**20))

    # --- advisory cost estimate (dense upper bound; includes x re-reads).
    flops = 2 * n_rows * n_cols * fin_p + 2 * n_rows * fin_p * fout_p
    bytes_accessed = (
        n_rows * n_cols * adj_bytes
        + nrb * min(kb * tk, n_cols) * fin_p * cd_bytes
        + fin_p * fout_p * cd_bytes
        + (fout_p * 4 if has_bias else 0)
        + n_rows * fout_p * od_bytes
    )

    out_p = pl.pallas_call(
        functools.partial(_gcn_kernel, has_bias, compute_dtype),
        out_shape=jax.ShapeDtypeStruct((n_rows, fout_p), out_dtype),
        grid_spec=pltpu.PrefetchScalarGridSpec(
            num_scalar_prefetch=2,
            grid=(nrb, kb),
            in_specs=in_specs,
            out_specs=out_specs,
            scratch_shapes=[pltpu.VMEM((tm, fin_p), jnp.float32)],
        ),
        compiler_params=pltpu.CompilerParams(
            dimension_semantics=("parallel", "arbitrary"),
            vmem_limit_bytes=int(vmem_limit_bytes),
        ),
        cost_estimate=pl.CostEstimate(
            flops=flops, transcendentals=0, bytes_accessed=bytes_accessed
        ),
    )(*operands)

    return out_p[:n, :fout]


def init_params(key, in_features, out_features, bias=True, dtype=jnp.float32):
    """Matches PyTorch reset_parameters: uniform(-stdv, stdv), stdv = 1/sqrt(out_features)."""
    stdv = 1.0 / math.sqrt(out_features)
    k_w, k_b = jax.random.split(key)
    weight = jax.random.uniform(
        k_w, (in_features, out_features), dtype=dtype, minval=-stdv, maxval=stdv
    )
    b = (
        jax.random.uniform(k_b, (out_features,), dtype=dtype, minval=-stdv, maxval=stdv)
        if bias
        else None
    )
    return weight, b


if __name__ == "__main__":
    key = jax.random.PRNGKey(0)
    k_x, k_adj, k_p, k_x2, k_adj2 = jax.random.split(key, 5)

    IN_FEATURES = 32
    OUT_FEATURES = 64
    weight, bias = init_params(k_p, IN_FEATURES, OUT_FEATURES, bias=True)

    # ---------------- Test 1: random-dense adjacency, with bias ----------------
    N = 384  # resolves to tm=192 (2 row tiles for v7x), tk=384, no padding
    x = jax.random.normal(k_x, (N, IN_FEATURES), dtype=jnp.float32)
    raw = jax.random.uniform(k_adj, (N, N), dtype=jnp.float32)
    adj = jnp.where(raw > 0.7, raw, 0.0)
    adj = adj + jnp.eye(N, dtype=jnp.float32)
    adj = adj / jnp.sum(adj, axis=1, keepdims=True)

    support = jnp.dot(x, weight, precision=jax.lax.Precision.HIGHEST)
    ref = jnp.dot(adj, support, precision=jax.lax.Precision.HIGHEST) + bias[None, :]

    # f32 compute path: tight check.
    out_f32 = sp_graph_convolution(x, adj, weight, bias, compute_dtype=jnp.float32)
    out_f32 = jax.block_until_ready(out_f32)
    assert out_f32.shape == (N, OUT_FEATURES)
    assert jnp.allclose(out_f32, ref, atol=1e-3, rtol=1e-3)

    # bf16 compute path (adj cast in-kernel, f32 accumulation): looser check.
    out_bf16 = sp_graph_convolution(x, adj, weight, bias)
    out_bf16 = jax.block_until_ready(out_bf16)
    assert out_bf16.shape == (N, OUT_FEATURES)
    assert jnp.allclose(out_bf16, ref, atol=2e-2, rtol=2e-2)

    # ------- Test 2: block-banded sparse adjacency, no bias, sparsity skip ------
    N2 = 512  # with tm=tk=128 -> 4x4 block grid, band => <=3 nonzero blocks/row
    x2 = jax.random.normal(k_x2, (N2, IN_FEATURES), dtype=jnp.float32)
    blk = jnp.arange(N2) // 128
    band = jnp.abs(blk[:, None] - blk[None, :]) <= 1
    raw2 = jax.random.uniform(k_adj2, (N2, N2), dtype=jnp.float32)
    adj2 = jnp.where(jnp.logical_and(band, raw2 > 0.8), raw2, 0.0)
    adj2 = adj2 + jnp.eye(N2, dtype=jnp.float32)
    adj2 = adj2 / jnp.sum(adj2, axis=1, keepdims=True)

    support2 = jnp.dot(x2, weight, precision=jax.lax.Precision.HIGHEST)
    ref2 = jnp.dot(adj2, support2, precision=jax.lax.Precision.HIGHEST)

    out_sparse = sp_graph_convolution(
        x2, adj2, weight, bias=None, tm=128, tk=128, max_blocks_per_row=3
    )
    out_dense = sp_graph_convolution(
        x2, adj2, weight, bias=None, tm=128, tk=128, block_sparse=False
    )
    out_sparse = jax.block_until_ready(out_sparse)
    out_dense = jax.block_until_ready(out_dense)
    assert out_sparse.shape == (N2, OUT_FEATURES)
    assert jnp.allclose(out_sparse, ref2, atol=2e-2, rtol=2e-2)
    assert jnp.allclose(out_dense, ref2, atol=2e-2, rtol=2e-2)
    # Skipped blocks are exactly zero, so sparse and dense paths agree tightly.
    assert jnp.allclose(out_sparse, out_dense, atol=1e-5, rtol=1e-5)

    print("KERNEL_OK")
</pallas_src>

<mosaic_0001>
module attributes {stable_mosaic.version = 11 : i64} {
  func.func @_gcn_kernel(%arg0: i32, %arg1: i32, %arg2: memref<2x1xi32, #tpu.memory_space<smem>>, %arg3: memref<2xi32, #tpu.memory_space<smem>>, %arg4: memref<192x384xf32, #tpu.memory_space<vmem>>, %arg5: memref<384x128xf32, #tpu.memory_space<vmem>>, %arg6: memref<128x128xf32, #tpu.memory_space<vmem>>, %arg7: memref<1x128xf32, #tpu.memory_space<vmem>>, %arg8: memref<192x128xf32, #tpu.memory_space<vmem>>, %arg9: memref<192x128xf32, #tpu.memory_space<vmem>>) attributes {dimension_semantics = [#tpu.dimension_semantics<parallel>, #tpu.dimension_semantics<arbitrary>], iteration_bounds = array<i64: 2, 1>, scalar_prefetch = 2 : i64, scratch_operands = 1 : i64, tpu.core_type = #tpu.core_type<tc>, window_params = [{transform_indices = @transform_0, window_bounds = array<i64: 192, 384>}, {transform_indices = @transform_1, window_bounds = array<i64: 384, 128>}, {pipeline_mode = #tpu.pipeline_mode<synchronous>, transform_indices = @transform_2, window_bounds = array<i64: 128, 128>}, {pipeline_mode = #tpu.pipeline_mode<synchronous>, transform_indices = @transform_3, window_bounds = array<i64: 1, 128>}, {transform_indices = @transform_4, window_bounds = array<i64: 192, 128>}]} {
    %c0_i32 = arith.constant 0 : i32
    %0 = arith.cmpi eq, %arg1, %c0_i32 : i32
    %1 = arith.extui %0 : i1 to i32
    %c0_i32_0 = arith.constant 0 : i32
    %2 = arith.cmpi ne, %1, %c0_i32_0 : i32
    scf.if %2 {
      %cst = arith.constant 0.000000e+00 : f32
      %11 = vector.broadcast %cst : f32 to vector<192x128xf32>
      %c0 = arith.constant 0 : index
      %c0_4 = arith.constant 0 : index
      %12 = vector.load %arg9[%c0, %c0_4] : memref<192x128xf32, #tpu.memory_space<vmem>>, vector<192x128xf32>
      tpu.vector_store %arg9[%c0, %c0_4], %11 {strides = array<i32>} : memref<192x128xf32, #tpu.memory_space<vmem>>, vector<192x128xf32>,
    } else {
    }
    %3 = arith.index_cast %arg0 : i32 to index
    %4 = memref.load %arg3[%3] : memref<2xi32, #tpu.memory_space<smem>>
    %5 = arith.cmpi slt, %arg1, %4 : i32
    %6 = arith.extui %5 : i1 to i32
    %c0_i32_1 = arith.constant 0 : i32
    %7 = arith.cmpi ne, %6, %c0_i32_1 : i32
    scf.if %7 {
      %c0 = arith.constant 0 : index
      %c0_4 = arith.constant 0 : index
      %11 = vector.load %arg9[%c0, %c0_4] : memref<192x128xf32, #tpu.memory_space<vmem>>, vector<192x128xf32>
      %c0_5 = arith.constant 0 : index
      %c0_6 = arith.constant 0 : index
      %12 = vector.load %arg4[%c0_5, %c0_6] : memref<192x384xf32, #tpu.memory_space<vmem>>, vector<192x384xf32>
      %c0_7 = arith.constant 0 : index
      %c0_8 = arith.constant 0 : index
      %13 = vector.load %arg5[%c0_7, %c0_8] : memref<384x128xf32, #tpu.memory_space<vmem>>, vector<384x128xf32>
      %cst = arith.constant dense<0.000000e+00> : vector<192x128xf32>
      %14 = tpu.matmul %12, %13, %cst {dimension_numbers = #tpu.dot_dimension_numbers<[1], [0], [0], [1], [0, 0, 1, 1], [], []>} : vector<192x384xf32>, vector<384x128xf32>, vector<192x128xf32> -> vector<192x128xf32>
      %15 = arith.addf %11, %14 : vector<192x128xf32>
      %c0_9 = arith.constant 0 : index
      %c0_10 = arith.constant 0 : index
      %16 = vector.load %arg9[%c0_9, %c0_10] : memref<192x128xf32, #tpu.memory_space<vmem>>, vector<192x128xf32>
      tpu.vector_store %arg9[%c0_9, %c0_10], %15 {strides = array<i32>} : memref<192x128xf32, #tpu.memory_space<vmem>>, vector<192x128xf32>,
    } else {
    }
    %c0_i32_2 = arith.constant 0 : i32
    %8 = arith.cmpi eq, %arg1, %c0_i32_2 : i32
    %9 = arith.extui %8 : i1 to i32
    %c0_i32_3 = arith.constant 0 : i32
    %10 = arith.cmpi ne, %9, %c0_i32_3 : i32
    scf.if %10 {
      %c0 = arith.constant 0 : index
      %c0_4 = arith.constant 0 : index
      %11 = vector.load %arg9[%c0, %c0_4] : memref<192x128xf32, #tpu.memory_space<vmem>>, vector<192x128xf32>
      %c0_5 = arith.constant 0 : index
      %c0_6 = arith.constant 0 : index
      %12 = vector.load %arg6[%c0_5, %c0_6] : memref<128x128xf32, #tpu.memory_space<vmem>>, vector<128x128xf32>
      %cst = arith.constant dense<0.000000e+00> : vector<192x128xf32>
      %13 = tpu.matmul %11, %12, %cst {dimension_numbers = #tpu.dot_dimension_numbers<[1], [0], [0], [1], [0, 0, 1, 1], [], []>} : vector<192x128xf32>, vector<128x128xf32>, vector<192x128xf32> -> vector<192x128xf32>
      %c0_7 = arith.constant 0 : index
      %c0_8 = arith.constant 0 : index
      %14 = vector.load %arg7[%c0_7, %c0_8] : memref<1x128xf32, #tpu.memory_space<vmem>>, vector<1x128xf32>
      %15 = vector.broadcast %14 : vector<1x128xf32> to vector<192x128xf32>
      %16 = arith.addf %13, %15 : vector<192x128xf32>
      %c0_9 = arith.constant 0 : index
      %c0_10 = arith.constant 0 : index
      %17 = vector.load %arg8[%c0_9, %c0_10] : memref<192x128xf32, #tpu.memory_space<vmem>>, vector<192x128xf32>
      tpu.vector_store %arg8[%c0_9, %c0_10], %16 {strides = array<i32>} : memref<192x128xf32, #tpu.memory_space<vmem>>, vector<192x128xf32>,
    } else {
    }
    return
  }
  func.func @transform_0(%arg0: i32, %arg1: i32, %arg2: memref<2x1xi32, #tpu.memory_space<smem>>, %arg3: memref<2xi32, #tpu.memory_space<smem>>) -> (i32, i32) {
    %0 = arith.index_cast %arg0 : i32 to index
    %1 = arith.index_cast %arg1 : i32 to index
    %2 = memref.load %arg2[%0, %1] : memref<2x1xi32, #tpu.memory_space<smem>>
    %c0_i32 = arith.constant 0 : i32
    return %arg0, %2 : i32, i32
  }
  func.func @transform_1(%arg0: i32, %arg1: i32, %arg2: memref<2x1xi32, #tpu.memory_space<smem>>, %arg3: memref<2xi32, #tpu.memory_space<smem>>) -> (i32, i32) {
    %0 = arith.index_cast %arg0 : i32 to index
    %1 = arith.index_cast %arg1 : i32 to index
    %2 = memref.load %arg2[%0, %1] : memref<2x1xi32, #tpu.memory_space<smem>>
    %c0_i32 = arith.constant 0 : i32
    %c0_i32_0 = arith.constant 0 : i32
    return %2, %c0_i32 : i32, i32
  }
  func.func @transform_2(%arg0: i32, %arg1: i32, %arg2: memref<2x1xi32, #tpu.memory_space<smem>>, %arg3: memref<2xi32, #tpu.memory_space<smem>>) -> (i32, i32) {
    %c0_i32 = arith.constant 0 : i32
    %c0_i32_0 = arith.constant 0 : i32
    %c0_i32_1 = arith.constant 0 : i32
    return %c0_i32, %c0_i32_0 : i32, i32
  }
  func.func @transform_3(%arg0: i32, %arg1: i32, %arg2: memref<2x1xi32, #tpu.memory_space<smem>>, %arg3: memref<2xi32, #tpu.memory_space<smem>>) -> (i32, i32) {
    %c0_i32 = arith.constant 0 : i32
    %c0_i32_0 = arith.constant 0 : i32
    %c0_i32_1 = arith.constant 0 : i32
    return %c0_i32, %c0_i32_0 : i32, i32
  }
  func.func @transform_4(%arg0: i32, %arg1: i32, %arg2: memref<2x1xi32, #tpu.memory_space<smem>>, %arg3: memref<2xi32, #tpu.memory_space<smem>>) -> (i32, i32) {
    %c0_i32 = arith.constant 0 : i32
    %c0_i32_0 = arith.constant 0 : i32
    return %arg0, %c0_i32 : i32, i32
  }
}

</mosaic_0001>

<llo_original>
// kernel: tpu_custom_call.1
$region0: #{tpu_custom_call.1}
  #allocation0 [shape = 'u32[]', space=smem, size = 0x4, offset = 0x4, fixed_abs, tag = 'smem constant byte address 0x4 - core index']
  #allocation1 [shape = 'u32[144,128]{1,0:T(1,128)}', space=vmem, size = 0x12000, scoped, tag = 'internal scratch']
  #allocation2 [shape = 'f32[192,128]{1,0:T(8,128)}', space=vmem, size = 0x18000, scoped, tag = 'scratch operand']
  #allocation3 [shape = 's32[1]{0}', space=sflag, size = 0x4, scoped, tag = 'scoped memory for tpu_custom_call.1']
  #allocation4 [shape = 'u8[1024]{0}', space=smem, size = 0x400, scoped, tag = 'prefetched SMEM operand 0']
  #allocation5 [shape = 'u8[512]{0}', space=smem, size = 0x200, scoped, tag = 'prefetched SMEM operand 1']
  %s0 = inlined_call_operand.vmem [shape: s32[2,1], index: 0, kind: input, shape index: {}]
  %s1 = inlined_call_operand.vmem [shape: s32[2], index: 1, kind: input, shape index: {}]
  %s2 = inlined_call_operand.hbm [shape: f32[384,384], index: 2, kind: input, shape index: {}]
  %s3 = inlined_call_operand.hbm [shape: f32[384,128], index: 3, kind: input, shape index: {}]
  %s4 = inlined_call_operand.hbm [shape: f32[128,128], index: 4, kind: input, shape index: {}]
  %s5 = inlined_call_operand.vmem [shape: f32[1,128], index: 5, kind: input, shape index: {}]
  %s6 = inlined_call_operand.hbm [shape: f32[384,128], index: 6, kind: output, shape index: {}]
  %s7 = sld [smem:[#allocation0]]
  $region73: #{tpu_custom_call.1} parent=0
    _
  %s9 = ssub.s32 1, %s7
  %s10 = scalar_select 0, %s9, %s7
  %s11 = sshll.u32 %s0, 4
  %s12 = int_to_ptr.vmem [resolvable:$true] %s11
  %14 = dma.vmem_to_smem %s12, 32, [#allocation4], [#allocation3]
  %s15 = sshll.u32 %s1, 4
  %s16 = int_to_ptr.vmem [resolvable:$true] %s15
  %18 = dma.vmem_to_smem %s16, 16, [#allocation5], [#allocation3]
  %19 = dma.done [#allocation3], 48
  %20 = sfence
  $region1: #{tpu_custom_call.1} parent=0
    #allocation6 [shape = 'u8[589824]{0}', space=vmem, size = 0x90000, scoped, tag = 'input window, operand 2']
    #allocation7 [shape = 's32[2]{0}', space=sflag, size = 0x8, scoped, tag = 'scoped memory for tpu_custom_call.1']
    #allocation8 [shape = 's32[2]{0}', space=sflag, size = 0x8, scoped, tag = 'scoped memory for tpu_custom_call.1']
    #allocation9 [shape = 'u8[393216]{0}', space=vmem, size = 0x60000, scoped, tag = 'input window, operand 3']
    #allocation10 [shape = 's32[2]{0}', space=sflag, size = 0x8, scoped, tag = 'scoped memory for tpu_custom_call.1']
    #allocation11 [shape = 'u8[65536]{0}', space=vmem, size = 0x10000, scoped, tag = 'input window, operand 4, single buffered']
    #allocation12 [shape = 'u8[196608]{0}', space=vmem, size = 0x30000, scoped, tag = 'output window, operand 0']
    %21 = vsyncpa [#allocation7], 0
    %s22 = scalar_lea.sflag [#allocation7], 1
    %23 = vsyncpa %s22, 0
    %24 = vsyncpa [#allocation10], 0
    %s25 = scalar_lea.sflag [#allocation10], 1
    %26 = vsyncpa %s25, 0
    %27 = vsyncpa [#allocation8], 0
    %s28 = scalar_lea.sflag [#allocation8], 1
    %29 = vsyncpa %s28, 0
    loop: start=0, step=1, limit=4
    $region2: #{tpu_custom_call.1} parent=1 // loop_pre_header
      _
    $region3: #{tpu_custom_call.1} parent=1 // loop_header
      %s31 = sphi 0, %s35
      %p32 = scmp.ge.s32.totalorder %s31, 4
      %s38 = sphi 0, %s50
      %s39 = sphi 0, %s46
      %s40 = sphi 0, %s38
      %s41 = sphi 0, %s39
      %s42 = sphi 0, %s40
      %s43 = sphi 0, %s41
      %s71 = sphi 0, %s73
      %s74 = sphi 0, %s71
      %s75 = sphi 0, %s74
      %s91 = sphi 0, %s75
      %s113 = sphi 0, %s115
      %s116 = sphi 0, %s113
      %s117 = sphi 0, %s116
      %s133 = sphi 0, %s117
      %s137 = sphi 0, %s137
      %s139 = sphi 0, %s137
      %s140 = sphi 0, %s139
      %s154 = sphi 0, %s140
      %s158 = sphi 0, %s158
      %s160 = sphi 0, %s158
      %s161 = sphi 0, %s160
      %s175 = sphi 0, %s161
      %s181 = sphi 0, %s183
      %s184 = sphi 0, %s181
      %s185 = sphi 0, %s184
      %s201 = sphi 0, %s185
    $region4: #{tpu_custom_call.1} parent=1 // loop_header_branch
      %34 = sbr.rel (%p32) target = $region8
    $region5: #{tpu_custom_call.1} parent=1 // loop_body
      %s36 = ssub.s32 %s31, 1
      %s37 = ssub.s32 %s31, 2
      %s44 = sadd.s32 1, %s39
      %p45 = scmp.ge.s32.totalorder %s44, 1
      %s46 = scalar_select %p45, 0, %s44
      %s47 = sadd.s32 1, %s38
      %s48 = scalar_select %p45, %s47, %s38
      %p49 = scmp.ge.s32.totalorder %s48, 2
      %s50 = scalar_select %p49, 0, %s48
      %s51 = sshra.s32 %s39, 7
      %s52 = sand.u32 %s39, 127
      %s53 = sadd.s32 %s51, %s38
      %s54 = smul.u32 %s53, 128
      %s55 = sshra.s32 %s39, 7
      %s56 = sand.u32 %s39, 127
      %s57 = sadd.s32 %s54, %s56
      %s58 = sld [smem:[#allocation4 + %s57]]
      %s59 = sshra.s32 %s46, 7
      %s60 = sand.u32 %s46, 127
      %s61 = sadd.s32 %s59, %s50
      %s62 = smul.u32 %s61, 128
      %s63 = sshra.s32 %s46, 7
      %s64 = sand.u32 %s46, 127
      %s65 = sadd.s32 %s62, %s64
      %s66 = sld [smem:[#allocation4 + %s65]]
      %s67 = ssub.s32 %s38, %s50
      %s68 = ssub.s32 %s58, %s66
      %s69 = sor.u32 %s67, %s68
      %p70 = scmp.eq.s32.totalorder %s69, 0
      %s72 = sadd.s32 %s71, 1
      %s73 = scalar_select %p70, %s71, %s72
      %p76 = pneg %p70
      %p77 = scmp.eq.s32.totalorder %s31, 1
      %p78 = por %p76, %p77
      %p79 = scmp.ne.s32.totalorder %s71, %s74
      %p80 = scmp.eq.s32.totalorder %s31, 0
      %p81 = por %p79, %p80
      %p82 = scmp.ne.s32.totalorder %s71, %s74
      %p83 = scmp.eq.s32.totalorder %s36, 1
      %p84 = por %p82, %p83
      %p85 = scmp.ne.s32.totalorder %s74, %s75
      %p86 = scmp.eq.s32.totalorder %s36, 0
      %p87 = por %p85, %p86
      %p88 = scmp.ne.s32.totalorder %s74, %s75
      %p89 = scmp.eq.s32.totalorder %s37, 1
      %p90 = por %p88, %p89
      %p92 = scmp.ne.s32.totalorder %s75, %s91
      %p93 = scmp.eq.s32.totalorder %s37, 0
      %p94 = por %p92, %p93
      %s95 = sshra.s32 %s39, 7
      %s96 = sand.u32 %s39, 127
      %s97 = sadd.s32 %s95, %s38
      %s98 = smul.u32 %s97, 128
      %s99 = sshra.s32 %s39, 7
      %s100 = sand.u32 %s39, 127
      %s101 = sadd.s32 %s98, %s100
      %s102 = sld [smem:[#allocation4 + %s101]]
      %s103 = sshra.s32 %s46, 7
      %s104 = sand.u32 %s46, 127
      %s105 = sadd.s32 %s103, %s50
      %s106 = smul.u32 %s105, 128
      %s107 = sshra.s32 %s46, 7
      %s108 = sand.u32 %s46, 127
      %s109 = sadd.s32 %s106, %s108
      %s110 = sld [smem:[#allocation4 + %s109]]
      %s111 = ssub.s32 %s102, %s110
      %p112 = scmp.eq.s32.totalorder %s111, 0
      %s114 = sadd.s32 %s113, 1
      %s115 = scalar_select %p112, %s113, %s114
      %p118 = pneg %p112
      %p119 = scmp.eq.s32.totalorder %s31, 1
      %p120 = por %p118, %p119
      %p121 = scmp.ne.s32.totalorder %s113, %s116
      %p122 = scmp.eq.s32.totalorder %s31, 0
      %p123 = por %p121, %p122
      %p124 = scmp.ne.s32.totalorder %s113, %s116
      %p125 = scmp.eq.s32.totalorder %s36, 1
      %p126 = por %p124, %p125
      %p127 = scmp.ne.s32.totalorder %s116, %s117
      %p128 = scmp.eq.s32.totalorder %s36, 0
      %p129 = por %p127, %p128
      %p130 = scmp.ne.s32.totalorder %s116, %s117
      %p131 = scmp.eq.s32.totalorder %s37, 1
      %p132 = por %p130, %p131
      %p134 = scmp.ne.s32.totalorder %s117, %s133
      %p135 = scmp.eq.s32.totalorder %s37, 0
      %p136 = por %p134, %p135
      %s138 = sadd.s32 %s137, 1
      %p141 = scmp.eq.s32.totalorder %s31, 1
      %p142 = scmp.ne.s32.totalorder %s137, %s139
      %p143 = scmp.eq.s32.totalorder %s31, 0
      %p144 = por %p142, %p143
      %p145 = scmp.ne.s32.totalorder %s137, %s139
      %p146 = scmp.eq.s32.totalorder %s36, 1
      %p147 = por %p145, %p146
      %p148 = scmp.ne.s32.totalorder %s139, %s140
      %p149 = scmp.eq.s32.totalorder %s36, 0
      %p150 = por %p148, %p149
      %p151 = scmp.ne.s32.totalorder %s139, %s140
      %p152 = scmp.eq.s32.totalorder %s37, 1
      %p153 = por %p151, %p152
      %p155 = scmp.ne.s32.totalorder %s140, %s154
      %p156 = scmp.eq.s32.totalorder %s37, 0
      %p157 = por %p155, %p156
      %s159 = sadd.s32 %s158, 1
      %p162 = scmp.eq.s32.totalorder %s31, 1
      %p163 = scmp.ne.s32.totalorder %s158, %s160
      %p164 = scmp.eq.s32.totalorder %s31, 0
      %p165 = por %p163, %p164
      %p166 = scmp.ne.s32.totalorder %s158, %s160
      %p167 = scmp.eq.s32.totalorder %s36, 1
      %p168 = por %p166, %p167
      %p169 = scmp.ne.s32.totalorder %s160, %s161
      %p170 = scmp.eq.s32.totalorder %s36, 0
      %p171 = por %p169, %p170
      %p172 = scmp.ne.s32.totalorder %s160, %s161
      %p173 = scmp.eq.s32.totalorder %s37, 1
      %p174 = por %p172, %p173
      %p176 = scmp.ne.s32.totalorder %s161, %s175
      %p177 = scmp.eq.s32.totalorder %s37, 0
      %p178 = por %p176, %p177
      %s179 = ssub.s32 %s38, %s50
      %p180 = scmp.eq.s32.totalorder %s179, 0
      %s182 = sadd.s32 %s181, 1
      %s183 = scalar_select %p180, %s181, %s182
      %p186 = pneg %p180
      %p187 = scmp.eq.s32.totalorder %s31, 1
      %p188 = por %p186, %p187
      %p189 = scmp.ne.s32.totalorder %s181, %s184
      %p190 = scmp.eq.s32.totalorder %s31, 0
      %p191 = por %p189, %p190
      %p192 = scmp.ne.s32.totalorder %s181, %s184
      %p193 = scmp.eq.s32.totalorder %s36, 1
      %p194 = por %p192, %p193
      %p195 = scmp.ne.s32.totalorder %s184, %s185
      %p196 = scmp.eq.s32.totalorder %s36, 0
      %p197 = por %p195, %p196
      %p198 = scmp.ne.s32.totalorder %s184, %s185
      %p199 = scmp.eq.s32.totalorder %s37, 1
      %p200 = por %p198, %p199
      %p202 = scmp.ne.s32.totalorder %s185, %s201
      %p203 = scmp.eq.s32.totalorder %s37, 0
      %p204 = por %p202, %p203
      %p205 = scmp.le.s32.totalorder 1, %s31
      %p206 = scmp.lt.s32.totalorder %s31, 3
      %p207 = pnand %p205, %p206
      %p208 = pneg %p207
      // Predicated region
      $region9: #{tpu_custom_call.1} parent=5 // pred_check
        _
      $region10: #{tpu_custom_call.1} parent=5 // pred_check_branch
        %210 = sbr.rel (%p207) target = $region12
      $region11: #{tpu_custom_call.1} parent=5 // pred_region
        %s211 = ssub.s32 %s31, 1
        // Predicated region
        $region13: #{tpu_custom_call.1} parent=11 // pred_check
          %p212 = pneg %p150
        $region14: #{tpu_custom_call.1} parent=11 // pred_check_branch
          %214 = sbr.rel (%p212) target = $region16
        $region15: #{tpu_custom_call.1} parent=11 // pred_region
          %s216 = ssub.s32 2048, 2048
          %217 = vsyncadd [#allocation10], %s216
          %s218 = sshll.u32 [#allocation11], 4
          %s219 = int_to_ptr.vmem [resolvable:$true] %s218
          %224 = dma.hbm_to_vmem [thread:$0]  %s4, 2048, %s219, [#allocation10], 128, 128, 8
        $region16: #{tpu_custom_call.1} parent=11 // pred_fallthru
          _
        // Predicated region
        $region17: #{tpu_custom_call.1} parent=11 // pred_check
          %p225 = pneg %p171
        $region18: #{tpu_custom_call.1} parent=11 // pred_check_branch
          %227 = sbr.rel (%p225) target = $region20
        $region19: #{tpu_custom_call.1} parent=11 // pred_region
          _
        $region20: #{tpu_custom_call.1} parent=11 // pred_fallthru
          _
      $region12: #{tpu_custom_call.1} parent=5 // pred_fallthru
        _
      %p228 = scmp.lt.s32.totalorder %s31, 2
      // Predicated region
      $region21: #{tpu_custom_call.1} parent=5 // pred_check
        %p229 = pneg %p228
      $region22: #{tpu_custom_call.1} parent=5 // pred_check_branch
        %231 = sbr.rel (%p229) target = $region24
      $region23: #{tpu_custom_call.1} parent=5 // pred_region
        // Predicated region
        $region25: #{tpu_custom_call.1} parent=23 // pred_check
          %p232 = pneg %p81
        $region26: #{tpu_custom_call.1} parent=23 // pred_check_branch
          %234 = sbr.rel (%p232) target = $region28
        $region27: #{tpu_custom_call.1} parent=23 // pred_region
          %s235 = sand.u32 %s71, 1
          %s236 = scalar_lea.sflag [#allocation7], %s235
          %s237 = sand.u32 %s71, 1
          %s238 = smul.addr %s237, 576
          %s239 = scalar_lea.vmem [#allocation6], %s238
          %s240 = sshra.s32 %s39, 7
          %s241 = sand.u32 %s39, 127
          %s242 = sadd.s32 %s240, %s38
          %s243 = smul.u32 %s242, 128
          %s244 = sshra.s32 %s39, 7
          %s245 = sand.u32 %s39, 127
          %s246 = sadd.s32 %s243, %s245
          %s247 = sld [smem:[#allocation4 + %s246]]
          %s248 = smul.u32 24, %s38
          %s249 = smul.u32 3, %s247
          %s251 = ssub.s32 9216, 9216
          %252 = vsyncadd %s236, %s251
          %s253 = smul.addr %s248, 3
          %s254 = sadd.s32 %s249, %s253
          %s255 = smul.addr %s254, 128
          %s256 = scalar_lea.hbm %s2, %s255
          %s257 = sshll.u32 %s239, 4
          %s258 = int_to_ptr.vmem [resolvable:$true] %s257
          %263 = dma.hbm_to_vmem [thread:$0]  %s256, 9216, %s258, %s236, 384, 384, 24
        $region28: #{tpu_custom_call.1} parent=23 // pred_fallthru
          _
        // Predicated region
        $region29: #{tpu_custom_call.1} parent=23 // pred_check
          %p264 = pneg %p123
        $region30: #{tpu_custom_call.1} parent=23 // pred_check_branch
          %266 = sbr.rel (%p264) target = $region32
        $region31: #{tpu_custom_call.1} parent=23 // pred_region
          %s267 = sand.u32 %s31, 1
          %s268 = scalar_lea.sflag [#allocation10], %s267
          %s269 = sand.u32 %s113, 1
          %s270 = smul.addr %s269, 384
          %s271 = scalar_lea.vmem [#allocation9], %s270
          %s272 = sshra.s32 %s39, 7
          %s273 = sand.u32 %s39, 127
          %s274 = sadd.s32 %s272, %s38
          %s275 = smul.u32 %s274, 128
          %s276 = sshra.s32 %s39, 7
          %s277 = sand.u32 %s39, 127
          %s278 = sadd.s32 %s275, %s277
          %s279 = sld [smem:[#allocation4 + %s278]]
          %s280 = smul.u32 48, %s279
          %s282 = ssub.s32 6144, 6144
          %283 = vsyncadd %s268, %s282
          %s284 = smul.addr %s280, 128
          %s285 = scalar_lea.hbm %s3, %s284
          %s286 = sshll.u32 %s271, 4
          %s287 = int_to_ptr.vmem [resolvable:$true] %s286
          %292 = dma.hbm_to_vmem [thread:$0]  %s285, 6144, %s287, %s268, 128, 128, 8
        $region32: #{tpu_custom_call.1} parent=23 // pred_fallthru
          _
      $region24: #{tpu_custom_call.1} parent=5 // pred_fallthru
        _
      %p293 = scmp.le.s32.totalorder 1, %s31
      %p294 = scmp.lt.s32.totalorder %s31, 3
      %p295 = pnand %p293, %p294
      %p296 = pneg %p295
      // Predicated region
      $region33: #{tpu_custom_call.1} parent=5 // pred_check
        _
      $region34: #{tpu_custom_call.1} parent=5 // pred_check_branch
        %298 = sbr.rel (%p295) target = $region36
      $region35: #{tpu_custom_call.1} parent=5 // pred_region
        %s299 = ssub.s32 %s31, 1
        %s300 = sand.u32 %s74, 1
        %s301 = scalar_lea.sflag [#allocation7], %s300
        %s302 = sand.u32 %s74, 1
        %s303 = smul.addr %s302, 576
        %s304 = scalar_lea.vmem [#allocation6], %s303
        // Predicated region
        $region37: #{tpu_custom_call.1} parent=35 // pred_check
          %p305 = pneg %p87
        $region38: #{tpu_custom_call.1} parent=35 // pred_check_branch
          %307 = sbr.rel (%p305) target = $region40
        $region39: #{tpu_custom_call.1} parent=35 // pred_region
          %308 = dma.done %s301, 9216
        $region40: #{tpu_custom_call.1} parent=35 // pred_fallthru
          _
        %s309 = sand.u32 %s36, 1
        %s310 = scalar_lea.sflag [#allocation10], %s309
        %s311 = sand.u32 %s116, 1
        %s312 = smul.addr %s311, 384
        %s313 = scalar_lea.vmem [#allocation9], %s312
        // Predicated region
        $region41: #{tpu_custom_call.1} parent=35 // pred_check
          %p314 = pneg %p129
        $region42: #{tpu_custom_call.1} parent=35 // pred_check_branch
          %316 = sbr.rel (%p314) target = $region44
        $region43: #{tpu_custom_call.1} parent=35 // pred_region
          %317 = dma.done %s310, 6144
        $region44: #{tpu_custom_call.1} parent=35 // pred_fallthru
          _
        // Predicated region
        $region45: #{tpu_custom_call.1} parent=35 // pred_check
          %p318 = pneg %p150
        $region46: #{tpu_custom_call.1} parent=35 // pred_check_branch
          %320 = sbr.rel (%p318) target = $region48
        $region47: #{tpu_custom_call.1} parent=35 // pred_region
          %321 = dma.done [#allocation10], 2048
        $region48: #{tpu_custom_call.1} parent=35 // pred_fallthru
          _
        %s322 = sand.u32 %s74, 1
        %s323 = scalar_lea.sflag [#allocation7], %s322
        %s324 = sand.u32 %s74, 1
        %s325 = smul.addr %s324, 576
        %s326 = scalar_lea.vmem [#allocation6], %s325
        %p327 = pneg %p87
        %p328 = pneg %p84
        %s329 = sand.u32 %s36, 1
        %s330 = scalar_lea.sflag [#allocation10], %s329
        %s331 = sand.u32 %s116, 1
        %s332 = smul.addr %s331, 384
        %s333 = scalar_lea.vmem [#allocation9], %s332
        %p334 = pneg %p129
        %p335 = pneg %p126
        %p336 = pneg %p150
        %p337 = pneg %p147
        %p338 = pneg %p171
        %p339 = pneg %p168
        %p340 = pneg %p197
        %p341 = pneg %p194
        %s342 = sand.u32 %s184, 1
        %s343 = scalar_lea.sflag [#allocation8], %s342
        %s344 = sand.u32 %s184, 1
        %s345 = smul.addr %s344, 192
        %s346 = scalar_lea.vmem [#allocation12], %s345
        %s347 = sshra.s32 %s41, 7
        %s348 = sand.u32 %s41, 127
        %s349 = sadd.s32 %s347, %s40
        %s350 = smul.u32 %s349, 128
        %s351 = sshra.s32 %s41, 7
        %s352 = sand.u32 %s41, 127
        %s353 = sadd.s32 %s350, %s352
        %s354 = sld [smem:[#allocation4 + %s353]]
        %s355 = smul.u32 24, %s40
        %s356 = smul.u32 3, %s354
        %s357 = sshra.s32 %s41, 7
        %s358 = sand.u32 %s41, 127
        %s359 = sadd.s32 %s357, %s40
        %s360 = smul.u32 %s359, 128
        %s361 = sshra.s32 %s41, 7
        %s362 = sand.u32 %s41, 127
        %s363 = sadd.s32 %s360, %s362
        %s364 = sld [smem:[#allocation4 + %s363]]
        %s365 = smul.u32 48, %s364
        %s366 = smul.u32 24, %s40
        %p367 = scmp.eq.s32.totalorder %s41, 0
        // Predicated region
        $region49: #{tpu_custom_call.1} parent=35 // pred_check
          %p368 = pneg %p367
        $region50: #{tpu_custom_call.1} parent=35 // pred_check_branch
          %370 = sbr.rel (%p368) target = $region52
        $region51: #{tpu_custom_call.1} parent=35 // pred_region
          %371 = vst [vmem:[#allocation2] sm:$0xff] 0.0
          %372 = vst [vmem:[#allocation2 + $0x8] sm:$0xff] 0.0
          %373 = vst [vmem:[#allocation2 + $0x10] sm:$0xff] 0.0
          %374 = vst [vmem:[#allocation2 + $0x18] sm:$0xff] 0.0
          %375 = vst [vmem:[#allocation2 + $0x20] sm:$0xff] 0.0
          %376 = vst [vmem:[#allocation2 + $0x28] sm:$0xff] 0.0
          %377 = vst [vmem:[#allocation2 + $0x30] sm:$0xff] 0.0
          %378 = vst [vmem:[#allocation2 + $0x38] sm:$0xff] 0.0
          %379 = vst [vmem:[#allocation2 + $0x40] sm:$0xff] 0.0
          %380 = vst [vmem:[#allocation2 + $0x48] sm:$0xff] 0.0
          %381 = vst [vmem:[#allocation2 + $0x50] sm:$0xff] 0.0
          %382 = vst [vmem:[#allocation2 + $0x58] sm:$0xff] 0.0
          %383 = vst [vmem:[#allocation2 + $0x60] sm:$0xff] 0.0
          %384 = vst [vmem:[#allocation2 + $0x68] sm:$0xff] 0.0
          %385 = vst [vmem:[#allocation2 + $0x70] sm:$0xff] 0.0
          %386 = vst [vmem:[#allocation2 + $0x78] sm:$0xff] 0.0
          %387 = vst [vmem:[#allocation2 + $0x80] sm:$0xff] 0.0
          %388 = vst [vmem:[#allocation2 + $0x88] sm:$0xff] 0.0
          %389 = vst [vmem:[#allocation2 + $0x90] sm:$0xff] 0.0
          %390 = vst [vmem:[#allocation2 + $0x98] sm:$0xff] 0.0
          %391 = vst [vmem:[#allocation2 + $0xa0] sm:$0xff] 0.0
          %392 = vst [vmem:[#allocation2 + $0xa8] sm:$0xff] 0.0
          %393 = vst [vmem:[#allocation2 + $0xb0] sm:$0xff] 0.0
          %394 = vst [vmem:[#allocation2 + $0xb8] sm:$0xff] 0.0
        $region52: #{tpu_custom_call.1} parent=35 // pred_fallthru
          _
        %s395 = sld [smem:[#allocation5 + %s40]]
        %p396 = scmp.lt.s32.totalorder %s41, %s395
        // Predicated region
        $region53: #{tpu_custom_call.1} parent=35 // pred_check
          %p397 = pneg %p396
        $region54: #{tpu_custom_call.1} parent=35 // pred_check_branch
          %399 = sbr.rel (%p397) target = $region56
        $region55: #{tpu_custom_call.1} parent=35 // pred_region
          %v400 = vld [vmem:[#allocation2] sm:$0xff]
          %v401 = vld [vmem:[#allocation2 + $0x8] sm:$0xff]
          %v402 = vld [vmem:[#allocation2 + $0x10] sm:$0xff]
          %v403 = vld [vmem:[#allocation2 + $0x18] sm:$0xff]
          %v404 = vld [vmem:[#allocation2 + $0x20] sm:$0xff]
          %v405 = vld [vmem:[#allocation2 + $0x28] sm:$0xff]
          %v406 = vld [vmem:[#allocation2 + $0x30] sm:$0xff]
          %v407 = vld [vmem:[#allocation2 + $0x38] sm:$0xff]
          %v408 = vld [vmem:[#allocation2 + $0x40] sm:$0xff]
          %v409 = vld [vmem:[#allocation2 + $0x48] sm:$0xff]
          %v410 = vld [vmem:[#allocation2 + $0x50] sm:$0xff]
          %v411 = vld [vmem:[#allocation2 + $0x58] sm:$0xff]
          %v412 = vld [vmem:[#allocation2 + $0x60] sm:$0xff]
          %v413 = vld [vmem:[#allocation2 + $0x68] sm:$0xff]
          %v414 = vld [vmem:[#allocation2 + $0x70] sm:$0xff]
          %v415 = vld [vmem:[#allocation2 + $0x78] sm:$0xff]
          %v416 = vld [vmem:[#allocation2 + $0x80] sm:$0xff]
          %v417 = vld [vmem:[#allocation2 + $0x88] sm:$0xff]
          %v418 = vld [vmem:[#allocation2 + $0x90] sm:$0xff]
          %v419 = vld [vmem:[#allocation2 + $0x98] sm:$0xff]
          %v420 = vld [vmem:[#allocation2 + $0xa0] sm:$0xff]
          %v421 = vld [vmem:[#allocation2 + $0xa8] sm:$0xff]
          %v422 = vld [vmem:[#allocation2 + $0xb0] sm:$0xff]
          %v423 = vld [vmem:[#allocation2 + $0xb8] sm:$0xff]
          %v424 = vld [vmem:[%s304] sm:$0xff]
          %v425 = vld [vmem:[%s304 + $0x8] sm:$0xff]
          %v426 = vld [vmem:[%s304 + $0x10] sm:$0xff]
          %v427 = vld [vmem:[%s304 + $0x18] sm:$0xff]
          %v428 = vld [vmem:[%s304 + $0x20] sm:$0xff]
          %v429 = vld [vmem:[%s304 + $0x28] sm:$0xff]
          %v430 = vld [vmem:[%s304 + $0x30] sm:$0xff]
          %v431 = vld [vmem:[%s304 + $0x38] sm:$0xff]
          %v432 = vld [vmem:[%s304 + $0x40] sm:$0xff]
          %v433 = vld [vmem:[%s304 + $0x48] sm:$0xff]
          %v434 = vld [vmem:[%s304 + $0x50] sm:$0xff]
          %v435 = vld [vmem:[%s304 + $0x58] sm:$0xff]
          %v436 = vld [vmem:[%s304 + $0x60] sm:$0xff]
          %v437 = vld [vmem:[%s304 + $0x68] sm:$0xff]
          %v438 = vld [vmem:[%s304 + $0x70] sm:$0xff]
          %v439 = vld [vmem:[%s304 + $0x78] sm:$0xff]
          %v440 = vld [vmem:[%s304 + $0x80] sm:$0xff]
          %v441 = vld [vmem:[%s304 + $0x88] sm:$0xff]
          %v442 = vld [vmem:[%s304 + $0x90] sm:$0xff]
          %v443 = vld [vmem:[%s304 + $0x98] sm:$0xff]
          %v444 = vld [vmem:[%s304 + $0xa0] sm:$0xff]
          %v445 = vld [vmem:[%s304 + $0xa8] sm:$0xff]
          %v446 = vld [vmem:[%s304 + $0xb0] sm:$0xff]
          %v447 = vld [vmem:[%s304 + $0xb8] sm:$0xff]
          %v448 = vld [vmem:[%s304 + $0xc0] sm:$0xff]
          %v449 = vld [vmem:[%s304 + $0xc8] sm:$0xff]
          %v450 = vld [vmem:[%s304 + $0xd0] sm:$0xff]
          %v451 = vld [vmem:[%s304 + $0xd8] sm:$0xff]
          %v452 = vld [vmem:[%s304 + $0xe0] sm:$0xff]
          %v453 = vld [vmem:[%s304 + $0xe8] sm:$0xff]
          %v454 = vld [vmem:[%s304 + $0xf0] sm:$0xff]
          %v455 = vld [vmem:[%s304 + $0xf8] sm:$0xff]
          %v456 = vld [vmem:[%s304 + $0x100] sm:$0xff]
          %v457 = vld [vmem:[%s304 + $0x108] sm:$0xff]
          %v458 = vld [vmem:[%s304 + $0x110] sm:$0xff]
          %v459 = vld [vmem:[%s304 + $0x118] sm:$0xff]
          %v460 = vld [vmem:[%s304 + $0x120] sm:$0xff]
          %v461 = vld [vmem:[%s304 + $0x128] sm:$0xff]
          %v462 = vld [vmem:[%s304 + $0x130] sm:$0xff]
          %v463 = vld [vmem:[%s304 + $0x138] sm:$0xff]
          %v464 = vld [vmem:[%s304 + $0x140] sm:$0xff]
          %v465 = vld [vmem:[%s304 + $0x148] sm:$0xff]
          %v466 = vld [vmem:[%s304 + $0x150] sm:$0xff]
          %v467 = vld [vmem:[%s304 + $0x158] sm:$0xff]
          %v468 = vld [vmem:[%s304 + $0x160] sm:$0xff]
          %v469 = vld [vmem:[%s304 + $0x168] sm:$0xff]
          %v470 = vld [vmem:[%s304 + $0x170] sm:$0xff]
          %v471 = vld [vmem:[%s304 + $0x178] sm:$0xff]
          %v472 = vld [vmem:[%s304 + $0x180] sm:$0xff]
          %v473 = vld [vmem:[%s304 + $0x188] sm:$0xff]
          %v474 = vld [vmem:[%s304 + $0x190] sm:$0xff]
          %v475 = vld [vmem:[%s304 + $0x198] sm:$0xff]
          %v476 = vld [vmem:[%s304 + $0x1a0] sm:$0xff]
          %v477 = vld [vmem:[%s304 + $0x1a8] sm:$0xff]
          %v478 = vld [vmem:[%s304 + $0x1b0] sm:$0xff]
          %v479 = vld [vmem:[%s304 + $0x1b8] sm:$0xff]
          %v480 = vld [vmem:[%s304 + $0x1c0] sm:$0xff]
          %v481 = vld [vmem:[%s304 + $0x1c8] sm:$0xff]
          %v482 = vld [vmem:[%s304 + $0x1d0] sm:$0xff]
          %v483 = vld [vmem:[%s304 + $0x1d8] sm:$0xff]
          %v484 = vld [vmem:[%s304 + $0x1e0] sm:$0xff]
          %v485 = vld [vmem:[%s304 + $0x1e8] sm:$0xff]
          %v486 = vld [vmem:[%s304 + $0x1f0] sm:$0xff]
          %v487 = vld [vmem:[%s304 + $0x1f8] sm:$0xff]
          %v488 = vld [vmem:[%s304 + $0x200] sm:$0xff]
          %v489 = vld [vmem:[%s304 + $0x208] sm:$0xff]
          %v490 = vld [vmem:[%s304 + $0x210] sm:$0xff]
          %v491 = vld [vmem:[%s304 + $0x218] sm:$0xff]
          %v492 = vld [vmem:[%s304 + $0x220] sm:$0xff]
          %v493 = vld [vmem:[%s304 + $0x228] sm:$0xff]
          %v494 = vld [vmem:[%s304 + $0x230] sm:$0xff]
          %v495 = vld [vmem:[%s304 + $0x238] sm:$0xff]
          %v496 = vld [vmem:[%s313] sm:$0xff]
          %v497 = vld [vmem:[%s313 + $0x8] sm:$0xff]
          %v498 = vld [vmem:[%s313 + $0x10] sm:$0xff]
          %v499 = vld [vmem:[%s313 + $0x18] sm:$0xff]
          %v500 = vld [vmem:[%s313 + $0x20] sm:$0xff]
          %v501 = vld [vmem:[%s313 + $0x28] sm:$0xff]
          %v502 = vld [vmem:[%s313 + $0x30] sm:$0xff]
          %v503 = vld [vmem:[%s313 + $0x38] sm:$0xff]
          %v504 = vld [vmem:[%s313 + $0x40] sm:$0xff]
          %v505 = vld [vmem:[%s313 + $0x48] sm:$0xff]
          %v506 = vld [vmem:[%s313 + $0x50] sm:$0xff]
          %v507 = vld [vmem:[%s313 + $0x58] sm:$0xff]
          %v508 = vld [vmem:[%s313 + $0x60] sm:$0xff]
          %v509 = vld [vmem:[%s313 + $0x68] sm:$0xff]
          %v510 = vld [vmem:[%s313 + $0x70] sm:$0xff]
          %v511 = vld [vmem:[%s313 + $0x78] sm:$0xff]
          %v512 = vld [vmem:[%s313 + $0x80] sm:$0xff]
          %v513 = vld [vmem:[%s313 + $0x88] sm:$0xff]
          %v514 = vld [vmem:[%s313 + $0x90] sm:$0xff]
          %v515 = vld [vmem:[%s313 + $0x98] sm:$0xff]
          %v516 = vld [vmem:[%s313 + $0xa0] sm:$0xff]
          %v517 = vld [vmem:[%s313 + $0xa8] sm:$0xff]
          %v518 = vld [vmem:[%s313 + $0xb0] sm:$0xff]
          %v519 = vld [vmem:[%s313 + $0xb8] sm:$0xff]
          %v520 = vld [vmem:[%s313 + $0xc0] sm:$0xff]
          %v521 = vld [vmem:[%s313 + $0xc8] sm:$0xff]
          %v522 = vld [vmem:[%s313 + $0xd0] sm:$0xff]
          %v523 = vld [vmem:[%s313 + $0xd8] sm:$0xff]
          %v524 = vld [vmem:[%s313 + $0xe0] sm:$0xff]
          %v525 = vld [vmem:[%s313 + $0xe8] sm:$0xff]
          %v526 = vld [vmem:[%s313 + $0xf0] sm:$0xff]
          %v527 = vld [vmem:[%s313 + $0xf8] sm:$0xff]
          %v528 = vld [vmem:[%s313 + $0x100] sm:$0xff]
          %v529 = vld [vmem:[%s313 + $0x108] sm:$0xff]
          %v530 = vld [vmem:[%s313 + $0x110] sm:$0xff]
          %v531 = vld [vmem:[%s313 + $0x118] sm:$0xff]
          %v532 = vld [vmem:[%s313 + $0x120] sm:$0xff]
          %v533 = vld [vmem:[%s313 + $0x128] sm:$0xff]
          %v534 = vld [vmem:[%s313 + $0x130] sm:$0xff]
          %v535 = vld [vmem:[%s313 + $0x138] sm:$0xff]
          %v536 = vld [vmem:[%s313 + $0x140] sm:$0xff]
          %v537 = vld [vmem:[%s313 + $0x148] sm:$0xff]
          %v538 = vld [vmem:[%s313 + $0x150] sm:$0xff]
          %v539 = vld [vmem:[%s313 + $0x158] sm:$0xff]
          %v540 = vld [vmem:[%s313 + $0x160] sm:$0xff]
          %v541 = vld [vmem:[%s313 + $0x168] sm:$0xff]
          %v542 = vld [vmem:[%s313 + $0x170] sm:$0xff]
          %v543 = vld [vmem:[%s313 + $0x178] sm:$0xff]
          %544 = vmatprep.subr.mxu0 0.0
          %545 = vmatpush1.msra.mxu0 %v511
          %546 = vmatprep.subr.mxu0 0.0
          %547 = vmatpush1.msra.mxu0 %v510
          %548 = vmatprep.subr.mxu0 0.0
          %549 = vmatpush1.msra.mxu0 %v509
          %550 = vmatprep.subr.mxu0 0.0
          %551 = vmatpush1.msra.mxu0 %v508
          %552 = vmatprep.subr.mxu0 0.0
          %553 = vmatpush1.msra.mxu0 %v507
          %554 = vmatprep.subr.mxu0 0.0
          %555 = vmatpush1.msra.mxu0 %v506
          %556 = vmatprep.subr.mxu0 0.0
          %557 = vmatpush1.msra.mxu0 %v505
          %558 = vmatprep.subr.mxu0 0.0
          %559 = vmatpush1.msra.mxu0 %v504
          %560 = vmatprep.subr.mxu0 0.0
          %561 = vmatpush1.msra.mxu0 %v503
          %562 = vmatprep.subr.mxu0 0.0
          %563 = vmatpush1.msra.mxu0 %v502
          %564 = vmatprep.subr.mxu0 0.0
          %565 = vmatpush1.msra.mxu0 %v501
          %566 = vmatprep.subr.mxu0 0.0
          %567 = vmatpush1.msra.mxu0 %v500
          %568 = vmatprep.subr.mxu0 0.0
          %569 = vmatpush1.msra.mxu0 %v499
          %570 = vmatprep.subr.mxu0 0.0
          %571 = vmatpush1.msra.mxu0 %v498
          %572 = vmatprep.subr.mxu0 0.0
          %573 = vmatpush1.msra.mxu0 %v497
          %574 = vmatprep.subr.mxu0 0.0
          %575 = vmatpush1.msra.mxu0 %v496
          %576 = vmatprep.subr.mxu0 0.0
          %577 = vmatpush2.msra.mxu0 %v527
          %578 = vmatprep.subr.mxu0 0.0
          %579 = vmatpush2.msra.mxu0 %v526
          %580 = vmatprep.subr.mxu0 0.0
          %581 = vmatpush2.msra.mxu0 %v525
          %582 = vmatprep.subr.mxu0 0.0
          %583 = vmatpush2.msra.mxu0 %v524
          %584 = vmatprep.subr.mxu0 0.0
          %585 = vmatpush2.msra.mxu0 %v523
          %586 = vmatprep.subr.mxu0 0.0
          %587 = vmatpush2.msra.mxu0 %v522
          %588 = vmatprep.subr.mxu0 0.0
          %589 = vmatpush2.msra.mxu0 %v521
          %590 = vmatprep.subr.mxu0 0.0
          %591 = vmatpush2.msra.mxu0 %v520
          %592 = vmatprep.subr.mxu0 0.0
          %593 = vmatpush2.msra.mxu0 %v519
          %594 = vmatprep.subr.mxu0 0.0
          %595 = vmatpush2.msra.mxu0 %v518
          %596 = vmatprep.subr.mxu0 0.0
          %597 = vmatpush2.msra.mxu0 %v517
          %598 = vmatprep.subr.mxu0 0.0
          %599 = vmatpush2.msra.mxu0 %v516
          %600 = vmatprep.subr.mxu0 0.0
          %601 = vmatpush2.msra.mxu0 %v515
          %602 = vmatprep.subr.mxu0 0.0
          %603 = vmatpush2.msra.mxu0 %v514
          %604 = vmatprep.subr.mxu0 0.0
          %605 = vmatpush2.msra.mxu0 %v513
          %606 = vmatprep.subr.mxu0 0.0
          %607 = vmatpush2.msra.mxu0 %v512
          %608 = vmatprep.mubr.f32.mxu0 %v425
          %609 = vmatmul.mubr.f32.gmra.mxu0 %v424
          %v610 = vpop.f32.mrf.mxu0
          %v611 = vadd.f32 0.0, %v610
          %v612 = vpop.f32.mrf.mxu0
          %613 = vmatprep.mubr.f32.mxu0 %v428
          %614 = vmatmul.mubr.f32.gmra.mxu0 %v427
          %v615 = vpop.f32.mrf.mxu0
          %v616 = vadd.f32 0.0, %v615
          %v617 = vpop.f32.mrf.mxu0
          %618 = vmatprep.mubr.f32.mxu0 %v431
          %619 = vmatmul.mubr.f32.gmra.mxu0 %v430
          %v620 = vpop.f32.mrf.mxu0
          %v621 = vadd.f32 0.0, %v620
          %v622 = vpop.f32.mrf.mxu0
          %623 = vmatprep.mubr.f32.mxu0 %v434
          %624 = vmatmul.mubr.f32.gmra.mxu0 %v433
          %v625 = vpop.f32.mrf.mxu0
          %v626 = vadd.f32 0.0, %v625
          %v627 = vpop.f32.mrf.mxu0
          %628 = vmatprep.mubr.f32.mxu0 %v437
          %629 = vmatmul.mubr.f32.gmra.mxu0 %v436
          %v630 = vpop.f32.mrf.mxu0
          %v631 = vadd.f32 0.0, %v630
          %v632 = vpop.f32.mrf.mxu0
          %633 = vmatprep.mubr.f32.mxu0 %v440
          %634 = vmatmul.mubr.f32.gmra.mxu0 %v439
          %v635 = vpop.f32.mrf.mxu0
          %v636 = vadd.f32 0.0, %v635
          %v637 = vpop.f32.mrf.mxu0
          %638 = vmatprep.mubr.f32.mxu0 %v443
          %639 = vmatmul.mubr.f32.gmra.mxu0 %v442
          %v640 = vpop.f32.mrf.mxu0
          %v641 = vadd.f32 0.0, %v640
          %v642 = vpop.f32.mrf.mxu0
          %643 = vmatprep.mubr.f32.mxu0 %v446
          %644 = vmatmul.mubr.f32.gmra.mxu0 %v445
          %v645 = vpop.f32.mrf.mxu0
          %v646 = vadd.f32 0.0, %v645
          %v647 = vpop.f32.mrf.mxu0
          %648 = vmatprep.mubr.f32.mxu0 %v449
          %649 = vmatmul.mubr.f32.gmra.mxu0 %v448
          %v650 = vpop.f32.mrf.mxu0
          %v651 = vadd.f32 0.0, %v650
          %v652 = vpop.f32.mrf.mxu0
          %653 = vmatprep.mubr.f32.mxu0 %v452
          %654 = vmatmul.mubr.f32.gmra.mxu0 %v451
          %v655 = vpop.f32.mrf.mxu0
          %v656 = vadd.f32 0.0, %v655
          %v657 = vpop.f32.mrf.mxu0
          %658 = vmatprep.mubr.f32.mxu0 %v455
          %659 = vmatmul.mubr.f32.gmra.mxu0 %v454
          %v660 = vpop.f32.mrf.mxu0
          %v661 = vadd.f32 0.0, %v660
          %v662 = vpop.f32.mrf.mxu0
          %663 = vmatprep.mubr.f32.mxu0 %v458
          %664 = vmatmul.mubr.f32.gmra.mxu0 %v457
          %v665 = vpop.f32.mrf.mxu0
          %v666 = vadd.f32 0.0, %v665
          %v667 = vpop.f32.mrf.mxu0
          %668 = vmatprep.mubr.f32.mxu0 %v461
          %669 = vmatmul.mubr.f32.gmra.mxu0 %v460
          %v670 = vpop.f32.mrf.mxu0
          %v671 = vadd.f32 0.0, %v670
          %v672 = vpop.f32.mrf.mxu0
          %673 = vmatprep.mubr.f32.mxu0 %v464
          %674 = vmatmul.mubr.f32.gmra.mxu0 %v463
          %v675 = vpop.f32.mrf.mxu0
          %v676 = vadd.f32 0.0, %v675
          %v677 = vpop.f32.mrf.mxu0
          %678 = vmatprep.mubr.f32.mxu0 %v467
          %679 = vmatmul.mubr.f32.gmra.mxu0 %v466
          %v680 = vpop.f32.mrf.mxu0
          %v681 = vadd.f32 0.0, %v680
          %v682 = vpop.f32.mrf.mxu0
          %683 = vmatprep.mubr.f32.mxu0 %v470
          %684 = vmatmul.mubr.f32.gmra.mxu0 %v469
          %v685 = vpop.f32.mrf.mxu0
          %v686 = vadd.f32 0.0, %v685
          %v687 = vpop.f32.mrf.mxu0
          %688 = vmatprep.mubr.f32.mxu0 %v473
          %689 = vmatmul.mubr.f32.gmra.mxu0 %v472
          %v690 = vpop.f32.mrf.mxu0
          %v691 = vadd.f32 0.0, %v690
          %v692 = vpop.f32.mrf.mxu0
          %693 = vmatprep.mubr.f32.mxu0 %v476
          %694 = vmatmul.mubr.f32.gmra.mxu0 %v475
          %v695 = vpop.f32.mrf.mxu0
          %v696 = vadd.f32 0.0, %v695
          %v697 = vpop.f32.mrf.mxu0
          %698 = vmatprep.mubr.f32.mxu0 %v479
          %699 = vmatmul.mubr.f32.gmra.mxu0 %v478
          %v700 = vpop.f32.mrf.mxu0
          %v701 = vadd.f32 0.0, %v700
          %v702 = vpop.f32.mrf.mxu0
          %703 = vmatprep.mubr.f32.mxu0 %v482
          %704 = vmatmul.mubr.f32.gmra.mxu0 %v481
          %v705 = vpop.f32.mrf.mxu0
          %v706 = vadd.f32 0.0, %v705
          %v707 = vpop.f32.mrf.mxu0
          %708 = vmatprep.mubr.f32.mxu0 %v485
          %709 = vmatmul.mubr.f32.gmra.mxu0 %v484
          %v710 = vpop.f32.mrf.mxu0
          %v711 = vadd.f32 0.0, %v710
          %v712 = vpop.f32.mrf.mxu0
          %713 = vmatprep.mubr.f32.mxu0 %v488
          %714 = vmatmul.mubr.f32.gmra.mxu0 %v487
          %v715 = vpop.f32.mrf.mxu0
          %v716 = vadd.f32 0.0, %v715
          %v717 = vpop.f32.mrf.mxu0
          %718 = vmatprep.mubr.f32.mxu0 %v491
          %719 = vmatmul.mubr.f32.gmra.mxu0 %v490
          %v720 = vpop.f32.mrf.mxu0
          %v721 = vadd.f32 0.0, %v720
          %v722 = vpop.f32.mrf.mxu0
          %723 = vmatprep.mubr.f32.mxu0 %v494
          %724 = vmatmul.mubr.f32.gmra.mxu0 %v493
          %v725 = vpop.f32.mrf.mxu0
          %v726 = vadd.f32 0.0, %v725
          %v727 = vpop.f32.mrf.mxu0
          %728 = vdwg.mxu0
          %729 = vmatprep.subr.mxu0 0.0
          %730 = vmatpush1.msra.mxu0 %v543
          %731 = vmatprep.subr.mxu0 0.0
          %732 = vmatpush1.msra.mxu0 %v542
          %733 = vmatprep.subr.mxu0 0.0
          %734 = vmatpush1.msra.mxu0 %v541
          %735 = vmatprep.subr.mxu0 0.0
          %736 = vmatpush1.msra.mxu0 %v540
          %737 = vmatprep.subr.mxu0 0.0
          %738 = vmatpush1.msra.mxu0 %v539
          %739 = vmatprep.subr.mxu0 0.0
          %740 = vmatpush1.msra.mxu0 %v538
          %741 = vmatprep.subr.mxu0 0.0
          %742 = vmatpush1.msra.mxu0 %v537
          %743 = vmatprep.subr.mxu0 0.0
          %744 = vmatpush1.msra.mxu0 %v536
          %745 = vmatprep.subr.mxu0 0.0
          %746 = vmatpush1.msra.mxu0 %v535
          %747 = vmatprep.subr.mxu0 0.0
          %748 = vmatpush1.msra.mxu0 %v534
          %749 = vmatprep.subr.mxu0 0.0
          %750 = vmatpush1.msra.mxu0 %v533
          %751 = vmatprep.subr.mxu0 0.0
          %752 = vmatpush1.msra.mxu0 %v532
          %753 = vmatprep.subr.mxu0 0.0
          %754 = vmatpush1.msra.mxu0 %v531
          %755 = vmatprep.subr.mxu0 0.0
          %756 = vmatpush1.msra.mxu0 %v530
          %757 = vmatprep.subr.mxu0 0.0
          %758 = vmatpush1.msra.mxu0 %v529
          %759 = vmatprep.subr.mxu0 0.0
          %760 = vmatpush1.msra.mxu0 %v528
          %761 = vmatprep.subr.mxu0 0.0
          %762 = vmatpush2.msra.mxu0 0.0
          %763 = vmatprep.subr.mxu0 0.0
          %764 = vmatpush2.msra.mxu0 0.0
          %765 = vmatprep.subr.mxu0 0.0
          %766 = vmatpush2.msra.mxu0 0.0
          %767 = vmatprep.subr.mxu0 0.0
          %768 = vmatpush2.msra.mxu0 0.0
          %769 = vmatprep.subr.mxu0 0.0
          %770 = vmatpush2.msra.mxu0 0.0
          %771 = vmatprep.subr.mxu0 0.0
          %772 = vmatpush2.msra.mxu0 0.0
          %773 = vmatprep.subr.mxu0 0.0
          %774 = vmatpush2.msra.mxu0 0.0
          %775 = vmatprep.subr.mxu0 0.0
          %776 = vmatpush2.msra.mxu0 0.0
          %777 = vmatprep.subr.mxu0 0.0
          %778 = vmatpush2.msra.mxu0 0.0
          %779 = vmatprep.subr.mxu0 0.0
          %780 = vmatpush2.msra.mxu0 0.0
          %781 = vmatprep.subr.mxu0 0.0
          %782 = vmatpush2.msra.mxu0 0.0
          %783 = vmatprep.subr.mxu0 0.0
          %784 = vmatpush2.msra.mxu0 0.0
          %785 = vmatprep.subr.mxu0 0.0
          %786 = vmatpush2.msra.mxu0 0.0
          %787 = vmatprep.subr.mxu0 0.0
          %788 = vmatpush2.msra.mxu0 0.0
          %789 = vmatprep.subr.mxu0 0.0
          %790 = vmatpush2.msra.mxu0 0.0
          %791 = vmatprep.subr.mxu0 0.0
          %792 = vmatpush2.msra.mxu0 0.0
          %793 = vmatprep.mubr.f32.mxu0 0.0
          %794 = vmatmul.mubr.f32.gmra.mxu0 %v426
          %v795 = vpop.f32.mrf.mxu0
          %v796 = vadd.f32 %v611, %v795
          %v797 = vpop.f32.mrf.mxu0
          %798 = vmatprep.mubr.f32.mxu0 0.0
          %799 = vmatmul.mubr.f32.gmra.mxu0 %v429
          %v800 = vpop.f32.mrf.mxu0
          %v801 = vadd.f32 %v616, %v800
          %v802 = vpop.f32.mrf.mxu0
          %803 = vmatprep.mubr.f32.mxu0 0.0
          %804 = vmatmul.mubr.f32.gmra.mxu0 %v432
          %v805 = vpop.f32.mrf.mxu0
          %v806 = vadd.f32 %v621, %v805
          %v807 = vpop.f32.mrf.mxu0
          %808 = vmatprep.mubr.f32.mxu0 0.0
          %809 = vmatmul.mubr.f32.gmra.mxu0 %v435
          %v810 = vpop.f32.mrf.mxu0
          %v811 = vadd.f32 %v626, %v810
          %v812 = vpop.f32.mrf.mxu0
          %813 = vmatprep.mubr.f32.mxu0 0.0
          %814 = vmatmul.mubr.f32.gmra.mxu0 %v438
          %v815 = vpop.f32.mrf.mxu0
          %v816 = vadd.f32 %v631, %v815
          %v817 = vpop.f32.mrf.mxu0
          %818 = vmatprep.mubr.f32.mxu0 0.0
          %819 = vmatmul.mubr.f32.gmra.mxu0 %v441
          %v820 = vpop.f32.mrf.mxu0
          %v821 = vadd.f32 %v636, %v820
          %v822 = vpop.f32.mrf.mxu0
          %823 = vmatprep.mubr.f32.mxu0 0.0
          %824 = vmatmul.mubr.f32.gmra.mxu0 %v444
          %v825 = vpop.f32.mrf.mxu0
          %v826 = vadd.f32 %v641, %v825
          %v827 = vpop.f32.mrf.mxu0
          %828 = vmatprep.mubr.f32.mxu0 0.0
          %829 = vmatmul.mubr.f32.gmra.mxu0 %v447
          %v830 = vpop.f32.mrf.mxu0
          %v831 = vadd.f32 %v646, %v830
          %v832 = vpop.f32.mrf.mxu0
          %833 = vmatprep.mubr.f32.mxu0 0.0
          %834 = vmatmul.mubr.f32.gmra.mxu0 %v450
          %v835 = vpop.f32.mrf.mxu0
          %v836 = vadd.f32 %v651, %v835
          %v837 = vpop.f32.mrf.mxu0
          %838 = vmatprep.mubr.f32.mxu0 0.0
          %839 = vmatmul.mubr.f32.gmra.mxu0 %v453
          %v840 = vpop.f32.mrf.mxu0
          %v841 = vadd.f32 %v656, %v840
          %v842 = vpop.f32.mrf.mxu0
          %843 = vmatprep.mubr.f32.mxu0 0.0
          %844 = vmatmul.mubr.f32.gmra.mxu0 %v456
          %v845 = vpop.f32.mrf.mxu0
          %v846 = vadd.f32 %v661, %v845
          %v847 = vpop.f32.mrf.mxu0
          %848 = vmatprep.mubr.f32.mxu0 0.0
          %849 = vmatmul.mubr.f32.gmra.mxu0 %v459
          %v850 = vpop.f32.mrf.mxu0
          %v851 = vadd.f32 %v666, %v850
          %v852 = vpop.f32.mrf.mxu0
          %853 = vmatprep.mubr.f32.mxu0 0.0
          %854 = vmatmul.mubr.f32.gmra.mxu0 %v462
          %v855 = vpop.f32.mrf.mxu0
          %v856 = vadd.f32 %v671, %v855
          %v857 = vpop.f32.mrf.mxu0
          %858 = vmatprep.mubr.f32.mxu0 0.0
          %859 = vmatmul.mubr.f32.gmra.mxu0 %v465
          %v860 = vpop.f32.mrf.mxu0
          %v861 = vadd.f32 %v676, %v860
          %v862 = vpop.f32.mrf.mxu0
          %863 = vmatprep.mubr.f32.mxu0 0.0
          %864 = vmatmul.mubr.f32.gmra.mxu0 %v468
          %v865 = vpop.f32.mrf.mxu0
          %v866 = vadd.f32 %v681, %v865
          %v867 = vpop.f32.mrf.mxu0
          %868 = vmatprep.mubr.f32.mxu0 0.0
          %869 = vmatmul.mubr.f32.gmra.mxu0 %v471
          %v870 = vpop.f32.mrf.mxu0
          %v871 = vadd.f32 %v686, %v870
          %v872 = vpop.f32.mrf.mxu0
          %873 = vmatprep.mubr.f32.mxu0 0.0
          %874 = vmatmul.mubr.f32.gmra.mxu0 %v474
          %v875 = vpop.f32.mrf.mxu0
          %v876 = vadd.f32 %v691, %v875
          %v877 = vpop.f32.mrf.mxu0
          %878 = vmatprep.mubr.f32.mxu0 0.0
          %879 = vmatmul.mubr.f32.gmra.mxu0 %v477
          %v880 = vpop.f32.mrf.mxu0
          %v881 = vadd.f32 %v696, %v880
          %v882 = vpop.f32.mrf.mxu0
          %883 = vmatprep.mubr.f32.mxu0 0.0
          %884 = vmatmul.mubr.f32.gmra.mxu0 %v480
          %v885 = vpop.f32.mrf.mxu0
          %v886 = vadd.f32 %v701, %v885
          %v887 = vpop.f32.mrf.mxu0
          %888 = vmatprep.mubr.f32.mxu0 0.0
          %889 = vmatmul.mubr.f32.gmra.mxu0 %v483
          %v890 = vpop.f32.mrf.mxu0
          %v891 = vadd.f32 %v706, %v890
          %v892 = vpop.f32.mrf.mxu0
          %893 = vmatprep.mubr.f32.mxu0 0.0
          %894 = vmatmul.mubr.f32.gmra.mxu0 %v486
          %v895 = vpop.f32.mrf.mxu0
          %v896 = vadd.f32 %v711, %v895
          %v897 = vpop.f32.mrf.mxu0
          %898 = vmatprep.mubr.f32.mxu0 0.0
          %899 = vmatmul.mubr.f32.gmra.mxu0 %v489
          %v900 = vpop.f32.mrf.mxu0
          %v901 = vadd.f32 %v716, %v900
          %v902 = vpop.f32.mrf.mxu0
          %903 = vmatprep.mubr.f32.mxu0 0.0
          %904 = vmatmul.mubr.f32.gmra.mxu0 %v492
          %v905 = vpop.f32.mrf.mxu0
          %v906 = vadd.f32 %v721, %v905
          %v907 = vpop.f32.mrf.mxu0
          %908 = vmatprep.mubr.f32.mxu0 0.0
          %909 = vmatmul.mubr.f32.gmra.mxu0 %v495
          %v910 = vpop.f32.mrf.mxu0
          %v911 = vadd.f32 %v726, %v910
          %v912 = vpop.f32.mrf.mxu0
          %913 = vdwg.mxu0
          %v914 = vadd.f32 %v400, %v796
          %v915 = vadd.f32 %v401, %v801
          %v916 = vadd.f32 %v402, %v806
          %v917 = vadd.f32 %v403, %v811
          %v918 = vadd.f32 %v404, %v816
          %v919 = vadd.f32 %v405, %v821
          %v920 = vadd.f32 %v406, %v826
          %v921 = vadd.f32 %v407, %v831
          %v922 = vadd.f32 %v408, %v836
          %v923 = vadd.f32 %v409, %v841
          %v924 = vadd.f32 %v410, %v846
          %v925 = vadd.f32 %v411, %v851
          %v926 = vadd.f32 %v412, %v856
          %v927 = vadd.f32 %v413, %v861
          %v928 = vadd.f32 %v414, %v866
          %v929 = vadd.f32 %v415, %v871
          %v930 = vadd.f32 %v416, %v876
          %v931 = vadd.f32 %v417, %v881
          %v932 = vadd.f32 %v418, %v886
          %v933 = vadd.f32 %v419, %v891
          %v934 = vadd.f32 %v420, %v896
          %v935 = vadd.f32 %v421, %v901
          %v936 = vadd.f32 %v422, %v906
          %v937 = vadd.f32 %v423, %v911
          %938 = vst [vmem:[#allocation2] sm:$0xff] %v914
          %939 = vst [vmem:[#allocation2 + $0x8] sm:$0xff] %v915
          %940 = vst [vmem:[#allocation2 + $0x10] sm:$0xff] %v916
          %941 = vst [vmem:[#allocation2 + $0x18] sm:$0xff] %v917
          %942 = vst [vmem:[#allocation2 + $0x20] sm:$0xff] %v918
          %943 = vst [vmem:[#allocation2 + $0x28] sm:$0xff] %v919
          %944 = vst [vmem:[#allocation2 + $0x30] sm:$0xff] %v920
          %945 = vst [vmem:[#allocation2 + $0x38] sm:$0xff] %v921
          %946 = vst [vmem:[#allocation2 + $0x40] sm:$0xff] %v922
          %947 = vst [vmem:[#allocation2 + $0x48] sm:$0xff] %v923
          %948 = vst [vmem:[#allocation2 + $0x50] sm:$0xff] %v924
          %949 = vst [vmem:[#allocation2 + $0x58] sm:$0xff] %v925
          %950 = vst [vmem:[#allocation2 + $0x60] sm:$0xff] %v926
          %951 = vst [vmem:[#allocation2 + $0x68] sm:$0xff] %v927
          %952 = vst [vmem:[#allocation2 + $0x70] sm:$0xff] %v928
          %953 = vst [vmem:[#allocation2 + $0x78] sm:$0xff] %v929
          %954 = vst [vmem:[#allocation2 + $0x80] sm:$0xff] %v930
          %955 = vst [vmem:[#allocation2 + $0x88] sm:$0xff] %v931
          %956 = vst [vmem:[#allocation2 + $0x90] sm:$0xff] %v932
          %957 = vst [vmem:[#allocation2 + $0x98] sm:$0xff] %v933
          %958 = vst [vmem:[#allocation2 + $0xa0] sm:$0xff] %v934
          %959 = vst [vmem:[#allocation2 + $0xa8] sm:$0xff] %v935
          %960 = vst [vmem:[#allocation2 + $0xb0] sm:$0xff] %v936
          %961 = vst [vmem:[#allocation2 + $0xb8] sm:$0xff] %v937
        $region56: #{tpu_custom_call.1} parent=35 // pred_fallthru
          _
        // Predicated region
        $region57: #{tpu_custom_call.1} parent=35 // pred_check
          %p962 = pneg %p367
        $region58: #{tpu_custom_call.1} parent=35 // pred_check_branch
          %964 = sbr.rel (%p962) target = $region60
        $region59: #{tpu_custom_call.1} parent=35 // pred_region
          %v965 = vld [vmem:[#allocation2] sm:$0xff]
          %v966 = vld [vmem:[#allocation2 + $0x8] sm:$0xff]
          %v967 = vld [vmem:[#allocation2 + $0x10] sm:$0xff]
          %v968 = vld [vmem:[#allocation2 + $0x18] sm:$0xff]
          %v969 = vld [vmem:[#allocation2 + $0x20] sm:$0xff]
          %v970 = vld [vmem:[#allocation2 + $0x28] sm:$0xff]
          %v971 = vld [vmem:[#allocation2 + $0x30] sm:$0xff]
          %v972 = vld [vmem:[#allocation2 + $0x38] sm:$0xff]
          %v973 = vld [vmem:[#allocation2 + $0x40] sm:$0xff]
          %v974 = vld [vmem:[#allocation2 + $0x48] sm:$0xff]
          %v975 = vld [vmem:[#allocation2 + $0x50] sm:$0xff]
          %v976 = vld [vmem:[#allocation2 + $0x58] sm:$0xff]
          %v977 = vld [vmem:[#allocation2 + $0x60] sm:$0xff]
          %v978 = vld [vmem:[#allocation2 + $0x68] sm:$0xff]
          %v979 = vld [vmem:[#allocation2 + $0x70] sm:$0xff]
          %v980 = vld [vmem:[#allocation2 + $0x78] sm:$0xff]
          %v981 = vld [vmem:[#allocation2 + $0x80] sm:$0xff]
          %v982 = vld [vmem:[#allocation2 + $0x88] sm:$0xff]
          %v983 = vld [vmem:[#allocation2 + $0x90] sm:$0xff]
          %v984 = vld [vmem:[#allocation2 + $0x98] sm:$0xff]
          %v985 = vld [vmem:[#allocation2 + $0xa0] sm:$0xff]
          %v986 = vld [vmem:[#allocation2 + $0xa8] sm:$0xff]
          %v987 = vld [vmem:[#allocation2 + $0xb0] sm:$0xff]
          %v988 = vld [vmem:[#allocation2 + $0xb8] sm:$0xff]
          %v989 = vld [vmem:[#allocation11] sm:$0xff]
          %v990 = vld [vmem:[#allocation11 + $0x8] sm:$0xff]
          %v991 = vld [vmem:[#allocation11 + $0x10] sm:$0xff]
          %v992 = vld [vmem:[#allocation11 + $0x18] sm:$0xff]
          %v993 = vld [vmem:[#allocation11 + $0x20] sm:$0xff]
          %v994 = vld [vmem:[#allocation11 + $0x28] sm:$0xff]
          %v995 = vld [vmem:[#allocation11 + $0x30] sm:$0xff]
          %v996 = vld [vmem:[#allocation11 + $0x38] sm:$0xff]
          %v997 = vld [vmem:[#allocation11 + $0x40] sm:$0xff]
          %v998 = vld [vmem:[#allocation11 + $0x48] sm:$0xff]
          %v999 = vld [vmem:[#allocation11 + $0x50] sm:$0xff]
          %v1000 = vld [vmem:[#allocation11 + $0x58] sm:$0xff]
          %v1001 = vld [vmem:[#allocation11 + $0x60] sm:$0xff]
          %v1002 = vld [vmem:[#allocation11 + $0x68] sm:$0xff]
          %v1003 = vld [vmem:[#allocation11 + $0x70] sm:$0xff]
          %v1004 = vld [vmem:[#allocation11 + $0x78] sm:$0xff]
          %v1005 = vld [vmem:[%s5] sm:$0x1]
          %v1007 = vlaneseq
          %v1008 = vshrl.u32 %v1007, 7
          %v1009 = vsub.s32 0, %v1008
          %v1010 = vrot.slane %v1005, %v1009
          %1012 = vmatprep.subr.mxu0 0.0
          %1013 = vmatpush1.msra.mxu0 %v1004
          %1014 = vmatprep.subr.mxu0 0.0
          %1015 = vmatpush1.msra.mxu0 %v1003
          %1016 = vmatprep.subr.mxu0 0.0
          %1017 = vmatpush1.msra.mxu0 %v1002
          %1018 = vmatprep.subr.mxu0 0.0
          %1019 = vmatpush1.msra.mxu0 %v1001
          %1020 = vmatprep.subr.mxu0 0.0
          %1021 = vmatpush1.msra.mxu0 %v1000
          %1022 = vmatprep.subr.mxu0 0.0
          %1023 = vmatpush1.msra.mxu0 %v999
          %1024 = vmatprep.subr.mxu0 0.0
          %1025 = vmatpush1.msra.mxu0 %v998
          %1026 = vmatprep.subr.mxu0 0.0
          %1027 = vmatpush1.msra.mxu0 %v997
          %1028 = vmatprep.subr.mxu0 0.0
          %1029 = vmatpush1.msra.mxu0 %v996
          %1030 = vmatprep.subr.mxu0 0.0
          %1031 = vmatpush1.msra.mxu0 %v995
          %1032 = vmatprep.subr.mxu0 0.0
          %1033 = vmatpush1.msra.mxu0 %v994
          %1034 = vmatprep.subr.mxu0 0.0
          %1035 = vmatpush1.msra.mxu0 %v993
          %1036 = vmatprep.subr.mxu0 0.0
          %1037 = vmatpush1.msra.mxu0 %v992
          %1038 = vmatprep.subr.mxu0 0.0
          %1039 = vmatpush1.msra.mxu0 %v991
          %1040 = vmatprep.subr.mxu0 0.0
          %1041 = vmatpush1.msra.mxu0 %v990
          %1042 = vmatprep.subr.mxu0 0.0
          %1043 = vmatpush1.msra.mxu0 %v989
          %1044 = vmatprep.subr.mxu0 0.0
          %1045 = vmatpush2.msra.mxu0 0.0
          %1046 = vmatprep.subr.mxu0 0.0
          %1047 = vmatpush2.msra.mxu0 0.0
          %1048 = vmatprep.subr.mxu0 0.0
          %1049 = vmatpush2.msra.mxu0 0.0
          %1050 = vmatprep.subr.mxu0 0.0
          %1051 = vmatpush2.msra.mxu0 0.0
          %1052 = vmatprep.subr.mxu0 0.0
          %1053 = vmatpush2.msra.mxu0 0.0
          %1054 = vmatprep.subr.mxu0 0.0
          %1055 = vmatpush2.msra.mxu0 0.0
          %1056 = vmatprep.subr.mxu0 0.0
          %1057 = vmatpush2.msra.mxu0 0.0
          %1058 = vmatprep.subr.mxu0 0.0
          %1059 = vmatpush2.msra.mxu0 0.0
          %1060 = vmatprep.subr.mxu0 0.0
          %1061 = vmatpush2.msra.mxu0 0.0
          %1062 = vmatprep.subr.mxu0 0.0
          %1063 = vmatpush2.msra.mxu0 0.0
          %1064 = vmatprep.subr.mxu0 0.0
          %1065 = vmatpush2.msra.mxu0 0.0
          %1066 = vmatprep.subr.mxu0 0.0
          %1067 = vmatpush2.msra.mxu0 0.0
          %1068 = vmatprep.subr.mxu0 0.0
          %1069 = vmatpush2.msra.mxu0 0.0
          %1070 = vmatprep.subr.mxu0 0.0
          %1071 = vmatpush2.msra.mxu0 0.0
          %1072 = vmatprep.subr.mxu0 0.0
          %1073 = vmatpush2.msra.mxu0 0.0
          %1074 = vmatprep.subr.mxu0 0.0
          %1075 = vmatpush2.msra.mxu0 0.0
          %1076 = vmatprep.mubr.f32.mxu0 0.0
          %1077 = vmatmul.mubr.f32.gmra.mxu0 %v965
          %v1078 = vpop.f32.mrf.mxu0
          %v1079 = vadd.f32 %v1010, %v1078
          %v1080 = vpop.f32.mrf.mxu0
          %1081 = vmatprep.mubr.f32.mxu0 0.0
          %1082 = vmatmul.mubr.f32.gmra.mxu0 %v966
          %v1083 = vpop.f32.mrf.mxu0
          %v1084 = vadd.f32 %v1010, %v1083
          %v1085 = vpop.f32.mrf.mxu0
          %1086 = vmatprep.mubr.f32.mxu0 0.0
          %1087 = vmatmul.mubr.f32.gmra.mxu0 %v967
          %v1088 = vpop.f32.mrf.mxu0
          %v1089 = vadd.f32 %v1010, %v1088
          %v1090 = vpop.f32.mrf.mxu0
          %1091 = vmatprep.mubr.f32.mxu0 0.0
          %1092 = vmatmul.mubr.f32.gmra.mxu0 %v968
          %v1093 = vpop.f32.mrf.mxu0
          %v1094 = vadd.f32 %v1010, %v1093
          %v1095 = vpop.f32.mrf.mxu0
          %1096 = vmatprep.mubr.f32.mxu0 0.0
          %1097 = vmatmul.mubr.f32.gmra.mxu0 %v969
          %v1098 = vpop.f32.mrf.mxu0
          %v1099 = vadd.f32 %v1010, %v1098
          %v1100 = vpop.f32.mrf.mxu0
          %1101 = vmatprep.mubr.f32.mxu0 0.0
          %1102 = vmatmul.mubr.f32.gmra.mxu0 %v970
          %v1103 = vpop.f32.mrf.mxu0
          %v1104 = vadd.f32 %v1010, %v1103
          %v1105 = vpop.f32.mrf.mxu0
          %1106 = vmatprep.mubr.f32.mxu0 0.0
          %1107 = vmatmul.mubr.f32.gmra.mxu0 %v971
          %v1108 = vpop.f32.mrf.mxu0
          %v1109 = vadd.f32 %v1010, %v1108
          %v1110 = vpop.f32.mrf.mxu0
          %1111 = vmatprep.mubr.f32.mxu0 0.0
          %1112 = vmatmul.mubr.f32.gmra.mxu0 %v972
          %v1113 = vpop.f32.mrf.mxu0
          %v1114 = vadd.f32 %v1010, %v1113
          %v1115 = vpop.f32.mrf.mxu0
          %1116 = vmatprep.mubr.f32.mxu0 0.0
          %1117 = vmatmul.mubr.f32.gmra.mxu0 %v973
          %v1118 = vpop.f32.mrf.mxu0
          %v1119 = vadd.f32 %v1010, %v1118
          %v1120 = vpop.f32.mrf.mxu0
          %1121 = vmatprep.mubr.f32.mxu0 0.0
          %1122 = vmatmul.mubr.f32.gmra.mxu0 %v974
          %v1123 = vpop.f32.mrf.mxu0
          %v1124 = vadd.f32 %v1010, %v1123
          %v1125 = vpop.f32.mrf.mxu0
          %1126 = vmatprep.mubr.f32.mxu0 0.0
          %1127 = vmatmul.mubr.f32.gmra.mxu0 %v975
          %v1128 = vpop.f32.mrf.mxu0
          %v1129 = vadd.f32 %v1010, %v1128
          %v1130 = vpop.f32.mrf.mxu0
          %1131 = vmatprep.mubr.f32.mxu0 0.0
          %1132 = vmatmul.mubr.f32.gmra.mxu0 %v976
          %v1133 = vpop.f32.mrf.mxu0
          %v1134 = vadd.f32 %v1010, %v1133
          %v1135 = vpop.f32.mrf.mxu0
          %1136 = vmatprep.mubr.f32.mxu0 0.0
          %1137 = vmatmul.mubr.f32.gmra.mxu0 %v977
          %v1138 = vpop.f32.mrf.mxu0
          %v1139 = vadd.f32 %v1010, %v1138
          %v1140 = vpop.f32.mrf.mxu0
          %1141 = vmatprep.mubr.f32.mxu0 0.0
          %1142 = vmatmul.mubr.f32.gmra.mxu0 %v978
          %v1143 = vpop.f32.mrf.mxu0
          %v1144 = vadd.f32 %v1010, %v1143
          %v1145 = vpop.f32.mrf.mxu0
          %1146 = vmatprep.mubr.f32.mxu0 0.0
          %1147 = vmatmul.mubr.f32.gmra.mxu0 %v979
          %v1148 = vpop.f32.mrf.mxu0
          %v1149 = vadd.f32 %v1010, %v1148
          %v1150 = vpop.f32.mrf.mxu0
          %1151 = vmatprep.mubr.f32.mxu0 0.0
          %1152 = vmatmul.mubr.f32.gmra.mxu0 %v980
          %v1153 = vpop.f32.mrf.mxu0
          %v1154 = vadd.f32 %v1010, %v1153
          %v1155 = vpop.f32.mrf.mxu0
          %1156 = vmatprep.mubr.f32.mxu0 0.0
          %1157 = vmatmul.mubr.f32.gmra.mxu0 %v981
          %v1158 = vpop.f32.mrf.mxu0
          %v1159 = vadd.f32 %v1010, %v1158
          %v1160 = vpop.f32.mrf.mxu0
          %1161 = vmatprep.mubr.f32.mxu0 0.0
          %1162 = vmatmul.mubr.f32.gmra.mxu0 %v982
          %v1163 = vpop.f32.mrf.mxu0
          %v1164 = vadd.f32 %v1010, %v1163
          %v1165 = vpop.f32.mrf.mxu0
          %1166 = vmatprep.mubr.f32.mxu0 0.0
          %1167 = vmatmul.mubr.f32.gmra.mxu0 %v983
          %v1168 = vpop.f32.mrf.mxu0
          %v1169 = vadd.f32 %v1010, %v1168
          %v1170 = vpop.f32.mrf.mxu0
          %1171 = vmatprep.mubr.f32.mxu0 0.0
          %1172 = vmatmul.mubr.f32.gmra.mxu0 %v984
          %v1173 = vpop.f32.mrf.mxu0
          %v1174 = vadd.f32 %v1010, %v1173
          %v1175 = vpop.f32.mrf.mxu0
          %1176 = vmatprep.mubr.f32.mxu0 0.0
          %1177 = vmatmul.mubr.f32.gmra.mxu0 %v985
          %v1178 = vpop.f32.mrf.mxu0
          %v1179 = vadd.f32 %v1010, %v1178
          %v1180 = vpop.f32.mrf.mxu0
          %1181 = vmatprep.mubr.f32.mxu0 0.0
          %1182 = vmatmul.mubr.f32.gmra.mxu0 %v986
          %v1183 = vpop.f32.mrf.mxu0
          %v1184 = vadd.f32 %v1010, %v1183
          %v1185 = vpop.f32.mrf.mxu0
          %1186 = vmatprep.mubr.f32.mxu0 0.0
          %1187 = vmatmul.mubr.f32.gmra.mxu0 %v987
          %v1188 = vpop.f32.mrf.mxu0
          %v1189 = vadd.f32 %v1010, %v1188
          %v1190 = vpop.f32.mrf.mxu0
          %1191 = vmatprep.mubr.f32.mxu0 0.0
          %1192 = vmatmul.mubr.f32.gmra.mxu0 %v988
          %v1193 = vpop.f32.mrf.mxu0
          %v1194 = vadd.f32 %v1010, %v1193
          %v1195 = vpop.f32.mrf.mxu0
          %1196 = vdwg.mxu0
          %1197 = vst [vmem:[%s346] sm:$0xff] %v1079
          %1198 = vst [vmem:[%s346 + $0x8] sm:$0xff] %v1084
          %1199 = vst [vmem:[%s346 + $0x10] sm:$0xff] %v1089
          %1200 = vst [vmem:[%s346 + $0x18] sm:$0xff] %v1094
          %1201 = vst [vmem:[%s346 + $0x20] sm:$0xff] %v1099
          %1202 = vst [vmem:[%s346 + $0x28] sm:$0xff] %v1104
          %1203 = vst [vmem:[%s346 + $0x30] sm:$0xff] %v1109
          %1204 = vst [vmem:[%s346 + $0x38] sm:$0xff] %v1114
          %1205 = vst [vmem:[%s346 + $0x40] sm:$0xff] %v1119
          %1206 = vst [vmem:[%s346 + $0x48] sm:$0xff] %v1124
          %1207 = vst [vmem:[%s346 + $0x50] sm:$0xff] %v1129
          %1208 = vst [vmem:[%s346 + $0x58] sm:$0xff] %v1134
          %1209 = vst [vmem:[%s346 + $0x60] sm:$0xff] %v1139
          %1210 = vst [vmem:[%s346 + $0x68] sm:$0xff] %v1144
          %1211 = vst [vmem:[%s346 + $0x70] sm:$0xff] %v1149
          %1212 = vst [vmem:[%s346 + $0x78] sm:$0xff] %v1154
          %1213 = vst [vmem:[%s346 + $0x80] sm:$0xff] %v1159
          %1214 = vst [vmem:[%s346 + $0x88] sm:$0xff] %v1164
          %1215 = vst [vmem:[%s346 + $0x90] sm:$0xff] %v1169
          %1216 = vst [vmem:[%s346 + $0x98] sm:$0xff] %v1174
          %1217 = vst [vmem:[%s346 + $0xa0] sm:$0xff] %v1179
          %1218 = vst [vmem:[%s346 + $0xa8] sm:$0xff] %v1184
          %1219 = vst [vmem:[%s346 + $0xb0] sm:$0xff] %v1189
          %1220 = vst [vmem:[%s346 + $0xb8] sm:$0xff] %v1194
        $region60: #{tpu_custom_call.1} parent=35 // pred_fallthru
          _
        %s1221 = sand.u32 %s184, 1
        %s1222 = scalar_lea.sflag [#allocation8], %s1221
        %s1223 = sand.u32 %s184, 1
        %s1224 = smul.addr %s1223, 192
        %s1225 = scalar_lea.vmem [#allocation12], %s1224
        // Predicated region
        $region61: #{tpu_custom_call.1} parent=35 // pred_check
          %p1226 = pneg %p194
        $region62: #{tpu_custom_call.1} parent=35 // pred_check_branch
          %1228 = sbr.rel (%p1226) target = $region64
        $region63: #{tpu_custom_call.1} parent=35 // pred_region
          %s1229 = smul.u32 24, %s40
          %s1231 = ssub.s32 3072, 3072
          %1232 = vsyncadd %s1222, %s1231
          %s1233 = smul.addr %s1229, 128
          %s1234 = scalar_lea.hbm %s6, %s1233
          %s1235 = sshll.u32 %s1225, 4
          %s1236 = int_to_ptr.vmem [resolvable:$true] %s1235
          %1241 = dma.vmem_to_hbm [thread:$0]  %s1236, 3072, %s1234, %s1222, 128, 128, 8
        $region64: #{tpu_custom_call.1} parent=35 // pred_fallthru
          _
      $region36: #{tpu_custom_call.1} parent=5 // pred_fallthru
        _
      %p1242 = scmp.le.s32.totalorder 2, %s31
      // Predicated region
      $region65: #{tpu_custom_call.1} parent=5 // pred_check
        %p1243 = pneg %p1242
      $region66: #{tpu_custom_call.1} parent=5 // pred_check_branch
        %1245 = sbr.rel (%p1243) target = $region68
      $region67: #{tpu_custom_call.1} parent=5 // pred_region
        %s1246 = ssub.s32 %s31, 2
        // Predicated region
        $region69: #{tpu_custom_call.1} parent=67 // pred_check
          %p1247 = pneg %p200
        $region70: #{tpu_custom_call.1} parent=67 // pred_check_branch
          %1249 = sbr.rel (%p1247) target = $region72
        $region71: #{tpu_custom_call.1} parent=67 // pred_region
          %s1250 = sand.u32 %s185, 1
          %s1251 = scalar_lea.sflag [#allocation8], %s1250
          %s1252 = sand.u32 %s185, 1
          %s1253 = smul.addr %s1252, 192
          %s1254 = scalar_lea.vmem [#allocation12], %s1253
          %1255 = dma.done %s1251, 3072
        $region72: #{tpu_custom_call.1} parent=67 // pred_fallthru
          _
      $region68: #{tpu_custom_call.1} parent=5 // pred_fallthru
        _
    $region6: #{tpu_custom_call.1} parent=1 // loop_footer
      %s35 = sadd.s32 1, %s31
    $region7: #{tpu_custom_call.1} parent=1 // loop_footer_branch
      %30 = sbr.rel target = $region3
    $region8: #{tpu_custom_call.1} parent=1 // loop_exit
      _
    %1256 = vsyncpa [#allocation7], 1
    %s1257 = scalar_lea.sflag [#allocation7], 1
    %1258 = vsyncpa %s1257, 1
    %1259 = vsyncpa [#allocation10], 1
    %s1260 = scalar_lea.sflag [#allocation10], 1
    %1261 = vsyncpa %s1260, 1
    %1262 = vsyncpa [#allocation8], 1
    %s1263 = scalar_lea.sflag [#allocation8], 1
    %1264 = vsyncpa %s1263, 1

</llo_original>
